<compile_context>
chip_gen: v5e
topology: v5e:2x2
jax: 0.10.0
libtpu: 0.0.40
codegen_flags: <defaults>
</compile_context>

<pallas_src>
import functools
import math

import jax
import jax.numpy as jnp
from jax.experimental import pallas as pl
from jax.experimental.pallas import tpu as pltpu


def _mha_kernel(xq_ref, xkv_ref, wq_ref, wk_ref, wv_ref, wo_ref,
                bq_ref, bv_ref, bo_ref, out_ref, *, num_heads):
    """One grid step == one batch element x one query tile (channel-first)."""
    E = xq_ref.shape[1]
    TQ = xq_ref.shape[2]
    L = xkv_ref.shape[2]
    hd = E // num_heads
    scale = 1.0 / math.sqrt(hd)

    xq = xq_ref[0].astype(jnp.bfloat16)     # (E, TQ)
    xkv = xkv_ref[0].astype(jnp.bfloat16)   # (E, L)

    wq = wq_ref[...].astype(jnp.bfloat16)   # (E, E) PyTorch-native layout
    wk = wk_ref[...].astype(jnp.bfloat16)
    wv = wv_ref[...].astype(jnp.bfloat16)

    # Channel-first projections: (E, E) @ (E, T) -> (E, T), f32 accumulation.
    q = jnp.dot(wq, xq, preferred_element_type=jnp.float32) + bq_ref[...]
    k = jnp.dot(wk, xkv, preferred_element_type=jnp.float32)   # bk cancels in softmax
    v = jnp.dot(wv, xkv, preferred_element_type=jnp.float32) + bv_ref[...]
    q = q * scale                                               # fold 1/sqrt(hd) into q

    # Head split: leading(sublane)-dim reshape only, lane dim untouched.
    qh = q.reshape(num_heads, hd, TQ)                           # f32
    kh = k.reshape(num_heads, hd, L).astype(jnp.bfloat16)
    vh = v.reshape(num_heads, hd, L).astype(jnp.bfloat16)

    # One small transpose of q (minor-dim swap) so the score einsum is a
    # canonical batched matmul; k/v (the L-sized tensors) stay untouched.
    qh = jnp.swapaxes(qh, 1, 2).astype(jnp.bfloat16)            # (nh, TQ, hd)

    # Scores for all heads at once: (nh, TQ, hd) x (nh, hd, L) -> (nh, TQ, L).
    s = jnp.einsum("hqd,hdk->hqk", qh, kh,
                   preferred_element_type=jnp.float32)

    # Numerically-stable softmax; normalisation deferred past the PV matmul.
    m = jnp.max(s, axis=-1, keepdims=True)
    p = jnp.exp(s - m)                                          # (nh, TQ, L) f32
    l = jnp.sum(p, axis=-1)                                     # (nh, TQ)

    # PV, channel-first output directly: (nh, hd, L) x (nh, TQ, L) -> (nh, hd, TQ).
    o = jnp.einsum("hdk,hqk->hdq", vh, p.astype(jnp.bfloat16),
                   preferred_element_type=jnp.float32)

    inv_l = pl.reciprocal(l, approx=True)                       # EUP, nearly free
    o = o * inv_l[:, None, :]                                   # per-(head, query) norm

    # Merge heads and apply the output projection, still channel-first.
    o = o.reshape(E, TQ).astype(jnp.bfloat16)
    wo = wo_ref[...].astype(jnp.bfloat16)
    y = jnp.dot(wo, o, preferred_element_type=jnp.float32) + bo_ref[...]
    out_ref[0] = y.astype(out_ref.dtype)


def cross_attention_block(query, key_value, params, num_heads, *, block_q=256):
    """query, key_value: (B, C, H, W) float32.  Returns (B, C, H, W)."""
    B, C, H, W = query.shape
    E, L = C, H * W
    assert E % num_heads == 0

    # PyTorch-native parameter layouts: wq/wk/wv/wo are (E, E), biases (E,).
    wq, wk, wv, wo, bq, bk, bv, bo = params
    del bk  # uniform key bias cancels exactly in the row-wise softmax

    # Channel-first token layout -> no transposes, only free reshapes.
    xq = query.reshape(B, E, L)
    xkv = key_value.reshape(B, E, L)
    bq2 = bq.reshape(E, 1).astype(jnp.float32)
    bv2 = bv.reshape(E, 1).astype(jnp.float32)
    bo2 = bo.reshape(E, 1).astype(jnp.float32)

    # Tile the query/token (lane) axis when it is 128-aligned; else take it whole.
    if L % 128 == 0 and L > block_q and L % block_q == 0:
        tq = block_q
    else:
        tq = L
    n_q = L // tq

    kernel = functools.partial(_mha_kernel, num_heads=num_heads)
    w_spec = pl.BlockSpec((E, E), lambda b, qi: (0, 0))
    b_spec = pl.BlockSpec((E, 1), lambda b, qi: (0, 0))
    xq_spec = pl.BlockSpec((1, E, tq), lambda b, qi: (b, 0, qi))
    xkv_spec = pl.BlockSpec((1, E, L), lambda b, qi: (b, 0, 0))

    out = pl.pallas_call(
        kernel,
        out_shape=jax.ShapeDtypeStruct((B, E, L), query.dtype),
        grid_spec=pltpu.PrefetchScalarGridSpec(
            num_scalar_prefetch=0,
            grid=(B, n_q),
            in_specs=[xq_spec, xkv_spec,
                      w_spec, w_spec, w_spec, w_spec,
                      b_spec, b_spec, b_spec],
            out_specs=xq_spec,
        ),
        compiler_params=pltpu.CompilerParams(
            dimension_semantics=("parallel", "parallel")),
    )(xq, xkv, wq, wk, wv, wo, bq2, bv2, bo2)

    return out.reshape(B, C, H, W)


def _ref_mha(query, key_value, params, num_heads):
    """Pure-JAX f32 reference of nn.MultiheadAttention forward (no dropout)."""
    wq, wk, wv, wo, bq, bk, bv, bo = params
    B, C, H, W = query.shape
    L, E = H * W, C
    hd = E // num_heads
    xq = query.reshape(B, C, L).transpose(0, 2, 1)      # (B, L, E)
    xkv = key_value.reshape(B, C, L).transpose(0, 2, 1)
    q = xq @ wq.T + bq
    k = xkv @ wk.T + bk
    v = xkv @ wv.T + bv
    qh = q.reshape(B, L, num_heads, hd).transpose(0, 2, 1, 3)
    kh = k.reshape(B, L, num_heads, hd).transpose(0, 2, 1, 3)
    vh = v.reshape(B, L, num_heads, hd).transpose(0, 2, 1, 3)
    s = jnp.einsum("bhqd,bhkd->bhqk", qh, kh) / math.sqrt(hd)
    p = jax.nn.softmax(s, axis=-1)
    o = jnp.einsum("bhqk,bhkd->bhqd", p, vh)
    o = o.transpose(0, 2, 1, 3).reshape(B, L, E)
    y = o @ wo.T + bo
    return y.transpose(0, 2, 1).reshape(B, C, H, W)


if __name__ == "__main__":
    B, C, H, W = 2, 32, 4, 4
    num_heads = 8
    E, L = C, H * W

    root = jax.random.PRNGKey(0)
    kq, kkv, kp = jax.random.split(root, 3)
    query = jax.random.normal(kq, (B, C, H, W), jnp.float32)
    key_value = jax.random.normal(kkv, (B, C, H, W), jnp.float32)

    # Deterministic synthetic nn.MultiheadAttention parameters in native
    # PyTorch layouts: in_proj slices wq/wk/wv (E, E), out_proj wo (E, E),
    # biases (E,).  (Kernel computes y[e,l] = sum_c W[e,c] x[c,l] + b[e].)
    pkeys = jax.random.split(kp, 8)
    s = 0.1
    wq = s * jax.random.normal(pkeys[0], (E, E), jnp.float32)
    wk = s * jax.random.normal(pkeys[1], (E, E), jnp.float32)
    wv = s * jax.random.normal(pkeys[2], (E, E), jnp.float32)
    wo = s * jax.random.normal(pkeys[3], (E, E), jnp.float32)
    bq = s * jax.random.normal(pkeys[4], (E,), jnp.float32)
    bk = s * jax.random.normal(pkeys[5], (E,), jnp.float32)
    bv = s * jax.random.normal(pkeys[6], (E,), jnp.float32)
    bo = s * jax.random.normal(pkeys[7], (E,), jnp.float32)
    params = (wq, wk, wv, wo, bq, bk, bv, bo)

    out = cross_attention_block(query, key_value, params, num_heads)
    out = jax.block_until_ready(out)
    assert out.shape == (B, C, H, W)

    # Correctness check vs pure-JAX f32 MHA reference (bf16 MXU operands in
    # the kernel -> loosened tolerance).
    ref = _ref_mha(query, key_value, params, num_heads)
    max_err = jnp.max(jnp.abs(out - ref))
    assert jnp.allclose(out, ref, atol=2e-2, rtol=2e-2), (
        f"max abs err = {max_err}")

    print("KERNEL_OK")
</pallas_src>

<mosaic_0001>
module attributes {stable_mosaic.version = 11 : i64} {
  func.func @_mha_kernel(%arg0: i32, %arg1: i32, %arg2: memref<1x32x16xf32, #tpu.memory_space<vmem>>, %arg3: memref<1x32x16xf32, #tpu.memory_space<vmem>>, %arg4: memref<32x32xf32, #tpu.memory_space<vmem>>, %arg5: memref<32x32xf32, #tpu.memory_space<vmem>>, %arg6: memref<32x32xf32, #tpu.memory_space<vmem>>, %arg7: memref<32x32xf32, #tpu.memory_space<vmem>>, %arg8: memref<32x1xf32, #tpu.memory_space<vmem>>, %arg9: memref<32x1xf32, #tpu.memory_space<vmem>>, %arg10: memref<32x1xf32, #tpu.memory_space<vmem>>, %arg11: memref<1x32x16xf32, #tpu.memory_space<vmem>>) attributes {dimension_semantics = [#tpu.dimension_semantics<parallel>, #tpu.dimension_semantics<parallel>], iteration_bounds = array<i64: 2, 1>, scalar_prefetch = 0 : i64, scratch_operands = 0 : i64, tpu.core_type = #tpu.core_type<tc>, window_params = [{transform_indices = @transform_0, window_bounds = array<i64: 1, 32, 16>}, {transform_indices = @transform_1, window_bounds = array<i64: 1, 32, 16>}, {pipeline_mode = #tpu.pipeline_mode<synchronous>, transform_indices = @transform_2, window_bounds = array<i64: 32, 32>}, {pipeline_mode = #tpu.pipeline_mode<synchronous>, transform_indices = @transform_3, window_bounds = array<i64: 32, 32>}, {pipeline_mode = #tpu.pipeline_mode<synchronous>, transform_indices = @transform_4, window_bounds = array<i64: 32, 32>}, {pipeline_mode = #tpu.pipeline_mode<synchronous>, transform_indices = @transform_5, window_bounds = array<i64: 32, 32>}, {pipeline_mode = #tpu.pipeline_mode<synchronous>, transform_indices = @transform_6, window_bounds = array<i64: 32, 1>}, {pipeline_mode = #tpu.pipeline_mode<synchronous>, transform_indices = @transform_7, window_bounds = array<i64: 32, 1>}, {pipeline_mode = #tpu.pipeline_mode<synchronous>, transform_indices = @transform_8, window_bounds = array<i64: 32, 1>}, {transform_indices = @transform_9, window_bounds = array<i64: 1, 32, 16>}]} {
    %c0 = arith.constant 0 : index
    %c0_0 = arith.constant 0 : index
    %c0_1 = arith.constant 0 : index
    %0 = vector.load %arg2[%c0, %c0_0, %c0_1] : memref<1x32x16xf32, #tpu.memory_space<vmem>>, vector<1x32x16xf32>
    %1 = vector.shape_cast %0 : vector<1x32x16xf32> to vector<32x16xf32>
    %2 = arith.truncf %1 : vector<32x16xf32> to vector<32x16xbf16>
    %c0_2 = arith.constant 0 : index
    %c0_3 = arith.constant 0 : index
    %c0_4 = arith.constant 0 : index
    %3 = vector.load %arg3[%c0_2, %c0_3, %c0_4] : memref<1x32x16xf32, #tpu.memory_space<vmem>>, vector<1x32x16xf32>
    %4 = vector.shape_cast %3 : vector<1x32x16xf32> to vector<32x16xf32>
    %5 = arith.truncf %4 : vector<32x16xf32> to vector<32x16xbf16>
    %c0_5 = arith.constant 0 : index
    %c0_6 = arith.constant 0 : index
    %6 = vector.load %arg4[%c0_5, %c0_6] : memref<32x32xf32, #tpu.memory_space<vmem>>, vector<32x32xf32>
    %7 = arith.truncf %6 : vector<32x32xf32> to vector<32x32xbf16>
    %c0_7 = arith.constant 0 : index
    %c0_8 = arith.constant 0 : index
    %8 = vector.load %arg5[%c0_7, %c0_8] : memref<32x32xf32, #tpu.memory_space<vmem>>, vector<32x32xf32>
    %9 = arith.truncf %8 : vector<32x32xf32> to vector<32x32xbf16>
    %c0_9 = arith.constant 0 : index
    %c0_10 = arith.constant 0 : index
    %10 = vector.load %arg6[%c0_9, %c0_10] : memref<32x32xf32, #tpu.memory_space<vmem>>, vector<32x32xf32>
    %11 = arith.truncf %10 : vector<32x32xf32> to vector<32x32xbf16>
    %cst = arith.constant dense<0.000000e+00> : vector<32x16xf32>
    %12 = tpu.matmul %7, %2, %cst {dimension_numbers = #tpu.dot_dimension_numbers<[1], [0], [0], [1], [0, 0, 1, 1], [], []>} : vector<32x32xbf16>, vector<32x16xbf16>, vector<32x16xf32> -> vector<32x16xf32>
    %c0_11 = arith.constant 0 : index
    %c0_12 = arith.constant 0 : index
    %13 = vector.load %arg8[%c0_11, %c0_12] : memref<32x1xf32, #tpu.memory_space<vmem>>, vector<32x1xf32>
    %14 = vector.broadcast %13 : vector<32x1xf32> to vector<32x16xf32>
    %15 = arith.addf %12, %14 : vector<32x16xf32>
    %cst_13 = arith.constant dense<0.000000e+00> : vector<32x16xf32>
    %16 = tpu.matmul %9, %5, %cst_13 {dimension_numbers = #tpu.dot_dimension_numbers<[1], [0], [0], [1], [0, 0, 1, 1], [], []>} : vector<32x32xbf16>, vector<32x16xbf16>, vector<32x16xf32> -> vector<32x16xf32>
    %cst_14 = arith.constant dense<0.000000e+00> : vector<32x16xf32>
    %17 = tpu.matmul %11, %5, %cst_14 {dimension_numbers = #tpu.dot_dimension_numbers<[1], [0], [0], [1], [0, 0, 1, 1], [], []>} : vector<32x32xbf16>, vector<32x16xbf16>, vector<32x16xf32> -> vector<32x16xf32>
    %c0_15 = arith.constant 0 : index
    %c0_16 = arith.constant 0 : index
    %18 = vector.load %arg9[%c0_15, %c0_16] : memref<32x1xf32, #tpu.memory_space<vmem>>, vector<32x1xf32>
    %19 = vector.broadcast %18 : vector<32x1xf32> to vector<32x16xf32>
    %20 = arith.addf %17, %19 : vector<32x16xf32>
    %cst_17 = arith.constant 5.000000e-01 : f32
    %21 = vector.broadcast %cst_17 : f32 to vector<32x16xf32>
    %22 = arith.mulf %15, %21 : vector<32x16xf32>
    %23 = vector.shape_cast %22 : vector<32x16xf32> to vector<8x4x16xf32>
    %24 = vector.shape_cast %16 : vector<32x16xf32> to vector<8x4x16xf32>
    %25 = arith.truncf %24 : vector<8x4x16xf32> to vector<8x4x16xbf16>
    %26 = vector.shape_cast %20 : vector<32x16xf32> to vector<8x4x16xf32>
    %27 = arith.truncf %26 : vector<8x4x16xf32> to vector<8x4x16xbf16>
    %28 = tpu.transpose %23, [0, 2, 1] : vector<8x4x16xf32> -> vector<8x16x4xf32>
    %29 = arith.truncf %28 : vector<8x16x4xf32> to vector<8x16x4xbf16>
    "tpu.trace_start"() <{level = 10 : i32, message = "hqd,hdk->hqk"}> : () -> ()
    %cst_18 = arith.constant dense<0.000000e+00> : vector<8x16x16xf32>
    %30 = tpu.matmul %29, %25, %cst_18 {dimension_numbers = #tpu.dot_dimension_numbers<[2], [1], [1], [2], [0, 0, 0, 1, 1, 2], [0], [0]>} : vector<8x16x4xbf16>, vector<8x4x16xbf16>, vector<8x16x16xf32> -> vector<8x16x16xf32>
    "tpu.trace_stop"() : () -> ()
    %cst_19 = arith.constant dense<0xFF800000> : vector<8x16xf32>
    %31 = vector.multi_reduction <maximumf>, %30, %cst_19 [2] : vector<8x16x16xf32> to vector<8x16xf32>
    %32 = vector.shape_cast %31 : vector<8x16xf32> to vector<8x16x1xf32>
    %33 = vector.broadcast %32 : vector<8x16x1xf32> to vector<8x16x16xf32>
    %34 = arith.subf %30, %33 : vector<8x16x16xf32>
    %35 = math.exp %34 : vector<8x16x16xf32>
    %cst_20 = arith.constant dense<0.000000e+00> : vector<8x16xf32>
    %36 = vector.multi_reduction <add>, %35, %cst_20 [2] : vector<8x16x16xf32> to vector<8x16xf32>
    %37 = arith.truncf %35 : vector<8x16x16xf32> to vector<8x16x16xbf16>
    "tpu.trace_start"() <{level = 10 : i32, message = "hdk,hqk->hdq"}> : () -> ()
    %cst_21 = arith.constant dense<0.000000e+00> : vector<8x4x16xf32>
    %38 = tpu.matmul %27, %37, %cst_21 {dimension_numbers = #tpu.dot_dimension_numbers<[2], [2], [1], [1], [0, 0, 0, 1, 1, 1], [0], [0]>} : vector<8x4x16xbf16>, vector<8x16x16xbf16>, vector<8x4x16xf32> -> vector<8x4x16xf32>
    "tpu.trace_stop"() : () -> ()
    %39 = tpu.reciprocal %36 {approx = true} : vector<8x16xf32> -> vector<8x16xf32>
    %40 = vector.shape_cast %39 : vector<8x16xf32> to vector<8x1x16xf32>
    %41 = vector.broadcast %40 : vector<8x1x16xf32> to vector<8x4x16xf32>
    %42 = arith.mulf %38, %41 : vector<8x4x16xf32>
    %43 = vector.shape_cast %42 : vector<8x4x16xf32> to vector<32x16xf32>
    %44 = arith.truncf %43 : vector<32x16xf32> to vector<32x16xbf16>
    %c0_22 = arith.constant 0 : index
    %c0_23 = arith.constant 0 : index
    %45 = vector.load %arg7[%c0_22, %c0_23] : memref<32x32xf32, #tpu.memory_space<vmem>>, vector<32x32xf32>
    %46 = arith.truncf %45 : vector<32x32xf32> to vector<32x32xbf16>
    %cst_24 = arith.constant dense<0.000000e+00> : vector<32x16xf32>
    %47 = tpu.matmul %46, %44, %cst_24 {dimension_numbers = #tpu.dot_dimension_numbers<[1], [0], [0], [1], [0, 0, 1, 1], [], []>} : vector<32x32xbf16>, vector<32x16xbf16>, vector<32x16xf32> -> vector<32x16xf32>
    %c0_25 = arith.constant 0 : index
    %c0_26 = arith.constant 0 : index
    %48 = vector.load %arg10[%c0_25, %c0_26] : memref<32x1xf32, #tpu.memory_space<vmem>>, vector<32x1xf32>
    %49 = vector.broadcast %48 : vector<32x1xf32> to vector<32x16xf32>
    %50 = arith.addf %47, %49 : vector<32x16xf32>
    %c0_27 = arith.constant 0 : index
    %c0_28 = arith.constant 0 : index
    %c0_29 = arith.constant 0 : index
    %51 = vector.load %arg11[%c0_27, %c0_28, %c0_29] : memref<1x32x16xf32, #tpu.memory_space<vmem>>, vector<1x32x16xf32>
    %52 = vector.shape_cast %51 : vector<1x32x16xf32> to vector<32x16xf32>
    %53 = vector.shape_cast %50 : vector<32x16xf32> to vector<1x32x16xf32>
    tpu.vector_store %arg11[%c0_27, %c0_28, %c0_29], %53 {strides = array<i32>} : memref<1x32x16xf32, #tpu.memory_space<vmem>>, vector<1x32x16xf32>,
    return
  }
  func.func @transform_0(%arg0: i32, %arg1: i32) -> (i32, i32, i32) {
    %c0_i32 = arith.constant 0 : i32
    %c0_i32_0 = arith.constant 0 : i32
    return %arg0, %c0_i32, %arg1 : i32, i32, i32
  }
  func.func @transform_1(%arg0: i32, %arg1: i32) -> (i32, i32, i32) {
    %c0_i32 = arith.constant 0 : i32
    %c0_i32_0 = arith.constant 0 : i32
    %c0_i32_1 = arith.constant 0 : i32
    return %arg0, %c0_i32, %c0_i32_0 : i32, i32, i32
  }
  func.func @transform_2(%arg0: i32, %arg1: i32) -> (i32, i32) {
    %c0_i32 = arith.constant 0 : i32
    %c0_i32_0 = arith.constant 0 : i32
    %c0_i32_1 = arith.constant 0 : i32
    return %c0_i32, %c0_i32_0 : i32, i32
  }
  func.func @transform_3(%arg0: i32, %arg1: i32) -> (i32, i32) {
    %c0_i32 = arith.constant 0 : i32
    %c0_i32_0 = arith.constant 0 : i32
    %c0_i32_1 = arith.constant 0 : i32
    return %c0_i32, %c0_i32_0 : i32, i32
  }
  func.func @transform_4(%arg0: i32, %arg1: i32) -> (i32, i32) {
    %c0_i32 = arith.constant 0 : i32
    %c0_i32_0 = arith.constant 0 : i32
    %c0_i32_1 = arith.constant 0 : i32
    return %c0_i32, %c0_i32_0 : i32, i32
  }
  func.func @transform_5(%arg0: i32, %arg1: i32) -> (i32, i32) {
    %c0_i32 = arith.constant 0 : i32
    %c0_i32_0 = arith.constant 0 : i32
    %c0_i32_1 = arith.constant 0 : i32
    return %c0_i32, %c0_i32_0 : i32, i32
  }
  func.func @transform_6(%arg0: i32, %arg1: i32) -> (i32, i32) {
    %c0_i32 = arith.constant 0 : i32
    %c0_i32_0 = arith.constant 0 : i32
    %c0_i32_1 = arith.constant 0 : i32
    return %c0_i32, %c0_i32_0 : i32, i32
  }
  func.func @transform_7(%arg0: i32, %arg1: i32) -> (i32, i32) {
    %c0_i32 = arith.constant 0 : i32
    %c0_i32_0 = arith.constant 0 : i32
    %c0_i32_1 = arith.constant 0 : i32
    return %c0_i32, %c0_i32_0 : i32, i32
  }
  func.func @transform_8(%arg0: i32, %arg1: i32) -> (i32, i32) {
    %c0_i32 = arith.constant 0 : i32
    %c0_i32_0 = arith.constant 0 : i32
    %c0_i32_1 = arith.constant 0 : i32
    return %c0_i32, %c0_i32_0 : i32, i32
  }
  func.func @transform_9(%arg0: i32, %arg1: i32) -> (i32, i32, i32) {
    %c0_i32 = arith.constant 0 : i32
    %c0_i32_0 = arith.constant 0 : i32
    return %arg0, %c0_i32, %arg1 : i32, i32, i32
  }
}

</mosaic_0001>

<llo_original>
// kernel: tpu_custom_call.1
$region0: #{tpu_custom_call.1}
  #allocation0 [shape = 'u32[]', space=smem, size = 0x4, offset = 0x4, fixed_abs, tag = 'smem constant byte address 0x4 - core index']
  #allocation1 [shape = 'u32[72,128]{1,0:T(1,128)}', space=vmem, size = 0x9000, scoped, tag = 'internal scratch']
  %s0 = inlined_call_operand.vmem [shape: f32[2,32,16], index: 0, kind: input, shape index: {}]
  %s1 = inlined_call_operand.vmem [shape: f32[2,32,16], index: 1, kind: input, shape index: {}]
  %s2 = inlined_call_operand.vmem [shape: f32[32,32], index: 2, kind: input, shape index: {}]
  %s3 = inlined_call_operand.vmem [shape: f32[32,32], index: 3, kind: input, shape index: {}]
  %s4 = inlined_call_operand.vmem [shape: f32[32,32], index: 4, kind: input, shape index: {}]
  %s5 = inlined_call_operand.vmem [shape: f32[32,32], index: 5, kind: input, shape index: {}]
  %s6 = inlined_call_operand.vmem [shape: f32[32,1], index: 6, kind: input, shape index: {}]
  %s7 = inlined_call_operand.vmem [shape: f32[32,1], index: 7, kind: input, shape index: {}]
  %s8 = inlined_call_operand.vmem [shape: f32[32,1], index: 8, kind: input, shape index: {}]
  %s9 = inlined_call_operand.vmem [shape: f32[2,32,16], index: 9, kind: output, shape index: {}]
  %s10 = sld [smem:[#allocation0]]
  $region69: #{tpu_custom_call.1} parent=0
    _
  %s12 = ssub.s32 1, %s10
  %s13 = scalar_select 0, %s12, %s10
  loop: start=0, step=1, limit=4
  $region2: #{tpu_custom_call.1} parent=0 // loop_pre_header
    _
  $region3: #{tpu_custom_call.1} parent=0 // loop_header
    %s15 = sphi 0, %s19
    %p16 = scmp.ge.s32.totalorder %s15, 4
    %s22 = sphi 0, %s34
    %s23 = sphi 0, %s30
    %s24 = sphi 0, %s22
    %s25 = sphi 0, %s23
    %s26 = sphi 0, %s24
    %s27 = sphi 0, %s25
    %s39 = sphi 0, %s41
    %s42 = sphi 0, %s39
    %s43 = sphi 0, %s42
    %s59 = sphi 0, %s43
    %s65 = sphi 0, %s67
    %s68 = sphi 0, %s65
    %s69 = sphi 0, %s68
    %s85 = sphi 0, %s69
    %s89 = sphi 0, %s89
    %s91 = sphi 0, %s89
    %s92 = sphi 0, %s91
    %s106 = sphi 0, %s92
    %s110 = sphi 0, %s110
    %s112 = sphi 0, %s110
    %s113 = sphi 0, %s112
    %s127 = sphi 0, %s113
    %s131 = sphi 0, %s131
    %s133 = sphi 0, %s131
    %s134 = sphi 0, %s133
    %s148 = sphi 0, %s134
    %s152 = sphi 0, %s152
    %s154 = sphi 0, %s152
    %s155 = sphi 0, %s154
    %s169 = sphi 0, %s155
    %s173 = sphi 0, %s173
    %s175 = sphi 0, %s173
    %s176 = sphi 0, %s175
    %s190 = sphi 0, %s176
    %s194 = sphi 0, %s194
    %s196 = sphi 0, %s194
    %s197 = sphi 0, %s196
    %s211 = sphi 0, %s197
    %s215 = sphi 0, %s215
    %s217 = sphi 0, %s215
    %s218 = sphi 0, %s217
    %s232 = sphi 0, %s218
    %s240 = sphi 0, %s242
    %s243 = sphi 0, %s240
    %s244 = sphi 0, %s243
    %s260 = sphi 0, %s244
  $region4: #{tpu_custom_call.1} parent=0 // loop_header_branch
    %18 = sbr.rel (%p16) target = $region8
  $region5: #{tpu_custom_call.1} parent=0 // loop_body
    %s20 = ssub.s32 %s15, 1
    %s21 = ssub.s32 %s15, 2
    %s28 = sadd.s32 1, %s23
    %p29 = scmp.ge.s32.totalorder %s28, 1
    %s30 = scalar_select %p29, 0, %s28
    %s31 = sadd.s32 1, %s22
    %s32 = scalar_select %p29, %s31, %s22
    %p33 = scmp.ge.s32.totalorder %s32, 2
    %s34 = scalar_select %p33, 0, %s32
    %s35 = ssub.s32 %s22, %s34
    %s36 = ssub.s32 %s23, %s30
    %s37 = sor.u32 %s35, %s36
    %p38 = scmp.eq.s32.totalorder %s37, 0
    %s40 = sadd.s32 %s39, 1
    %s41 = scalar_select %p38, %s39, %s40
    %p44 = pneg %p38
    %p45 = scmp.eq.s32.totalorder %s15, 1
    %p46 = por %p44, %p45
    %p47 = scmp.ne.s32.totalorder %s39, %s42
    %p48 = scmp.eq.s32.totalorder %s15, 0
    %p49 = por %p47, %p48
    %p50 = scmp.ne.s32.totalorder %s39, %s42
    %p51 = scmp.eq.s32.totalorder %s20, 1
    %p52 = por %p50, %p51
    %p53 = scmp.ne.s32.totalorder %s42, %s43
    %p54 = scmp.eq.s32.totalorder %s20, 0
    %p55 = por %p53, %p54
    %p56 = scmp.ne.s32.totalorder %s42, %s43
    %p57 = scmp.eq.s32.totalorder %s21, 1
    %p58 = por %p56, %p57
    %p60 = scmp.ne.s32.totalorder %s43, %s59
    %p61 = scmp.eq.s32.totalorder %s21, 0
    %p62 = por %p60, %p61
    %s63 = ssub.s32 %s22, %s34
    %p64 = scmp.eq.s32.totalorder %s63, 0
    %s66 = sadd.s32 %s65, 1
    %s67 = scalar_select %p64, %s65, %s66
    %p70 = pneg %p64
    %p71 = scmp.eq.s32.totalorder %s15, 1
    %p72 = por %p70, %p71
    %p73 = scmp.ne.s32.totalorder %s65, %s68
    %p74 = scmp.eq.s32.totalorder %s15, 0
    %p75 = por %p73, %p74
    %p76 = scmp.ne.s32.totalorder %s65, %s68
    %p77 = scmp.eq.s32.totalorder %s20, 1
    %p78 = por %p76, %p77
    %p79 = scmp.ne.s32.totalorder %s68, %s69
    %p80 = scmp.eq.s32.totalorder %s20, 0
    %p81 = por %p79, %p80
    %p82 = scmp.ne.s32.totalorder %s68, %s69
    %p83 = scmp.eq.s32.totalorder %s21, 1
    %p84 = por %p82, %p83
    %p86 = scmp.ne.s32.totalorder %s69, %s85
    %p87 = scmp.eq.s32.totalorder %s21, 0
    %p88 = por %p86, %p87
    %s90 = sadd.s32 %s89, 1
    %p93 = scmp.eq.s32.totalorder %s15, 1
    %p94 = scmp.ne.s32.totalorder %s89, %s91
    %p95 = scmp.eq.s32.totalorder %s15, 0
    %p96 = por %p94, %p95
    %p97 = scmp.ne.s32.totalorder %s89, %s91
    %p98 = scmp.eq.s32.totalorder %s20, 1
    %p99 = por %p97, %p98
    %p100 = scmp.ne.s32.totalorder %s91, %s92
    %p101 = scmp.eq.s32.totalorder %s20, 0
    %p102 = por %p100, %p101
    %p103 = scmp.ne.s32.totalorder %s91, %s92
    %p104 = scmp.eq.s32.totalorder %s21, 1
    %p105 = por %p103, %p104
    %p107 = scmp.ne.s32.totalorder %s92, %s106
    %p108 = scmp.eq.s32.totalorder %s21, 0
    %p109 = por %p107, %p108
    %s111 = sadd.s32 %s110, 1
    %p114 = scmp.eq.s32.totalorder %s15, 1
    %p115 = scmp.ne.s32.totalorder %s110, %s112
    %p116 = scmp.eq.s32.totalorder %s15, 0
    %p117 = por %p115, %p116
    %p118 = scmp.ne.s32.totalorder %s110, %s112
    %p119 = scmp.eq.s32.totalorder %s20, 1
    %p120 = por %p118, %p119
    %p121 = scmp.ne.s32.totalorder %s112, %s113
    %p122 = scmp.eq.s32.totalorder %s20, 0
    %p123 = por %p121, %p122
    %p124 = scmp.ne.s32.totalorder %s112, %s113
    %p125 = scmp.eq.s32.totalorder %s21, 1
    %p126 = por %p124, %p125
    %p128 = scmp.ne.s32.totalorder %s113, %s127
    %p129 = scmp.eq.s32.totalorder %s21, 0
    %p130 = por %p128, %p129
    %s132 = sadd.s32 %s131, 1
    %p135 = scmp.eq.s32.totalorder %s15, 1
    %p136 = scmp.ne.s32.totalorder %s131, %s133
    %p137 = scmp.eq.s32.totalorder %s15, 0
    %p138 = por %p136, %p137
    %p139 = scmp.ne.s32.totalorder %s131, %s133
    %p140 = scmp.eq.s32.totalorder %s20, 1
    %p141 = por %p139, %p140
    %p142 = scmp.ne.s32.totalorder %s133, %s134
    %p143 = scmp.eq.s32.totalorder %s20, 0
    %p144 = por %p142, %p143
    %p145 = scmp.ne.s32.totalorder %s133, %s134
    %p146 = scmp.eq.s32.totalorder %s21, 1
    %p147 = por %p145, %p146
    %p149 = scmp.ne.s32.totalorder %s134, %s148
    %p150 = scmp.eq.s32.totalorder %s21, 0
    %p151 = por %p149, %p150
    %s153 = sadd.s32 %s152, 1
    %p156 = scmp.eq.s32.totalorder %s15, 1
    %p157 = scmp.ne.s32.totalorder %s152, %s154
    %p158 = scmp.eq.s32.totalorder %s15, 0
    %p159 = por %p157, %p158
    %p160 = scmp.ne.s32.totalorder %s152, %s154
    %p161 = scmp.eq.s32.totalorder %s20, 1
    %p162 = por %p160, %p161
    %p163 = scmp.ne.s32.totalorder %s154, %s155
    %p164 = scmp.eq.s32.totalorder %s20, 0
    %p165 = por %p163, %p164
    %p166 = scmp.ne.s32.totalorder %s154, %s155
    %p167 = scmp.eq.s32.totalorder %s21, 1
    %p168 = por %p166, %p167
    %p170 = scmp.ne.s32.totalorder %s155, %s169
    %p171 = scmp.eq.s32.totalorder %s21, 0
    %p172 = por %p170, %p171
    %s174 = sadd.s32 %s173, 1
    %p177 = scmp.eq.s32.totalorder %s15, 1
    %p178 = scmp.ne.s32.totalorder %s173, %s175
    %p179 = scmp.eq.s32.totalorder %s15, 0
    %p180 = por %p178, %p179
    %p181 = scmp.ne.s32.totalorder %s173, %s175
    %p182 = scmp.eq.s32.totalorder %s20, 1
    %p183 = por %p181, %p182
    %p184 = scmp.ne.s32.totalorder %s175, %s176
    %p185 = scmp.eq.s32.totalorder %s20, 0
    %p186 = por %p184, %p185
    %p187 = scmp.ne.s32.totalorder %s175, %s176
    %p188 = scmp.eq.s32.totalorder %s21, 1
    %p189 = por %p187, %p188
    %p191 = scmp.ne.s32.totalorder %s176, %s190
    %p192 = scmp.eq.s32.totalorder %s21, 0
    %p193 = por %p191, %p192
    %s195 = sadd.s32 %s194, 1
    %p198 = scmp.eq.s32.totalorder %s15, 1
    %p199 = scmp.ne.s32.totalorder %s194, %s196
    %p200 = scmp.eq.s32.totalorder %s15, 0
    %p201 = por %p199, %p200
    %p202 = scmp.ne.s32.totalorder %s194, %s196
    %p203 = scmp.eq.s32.totalorder %s20, 1
    %p204 = por %p202, %p203
    %p205 = scmp.ne.s32.totalorder %s196, %s197
    %p206 = scmp.eq.s32.totalorder %s20, 0
    %p207 = por %p205, %p206
    %p208 = scmp.ne.s32.totalorder %s196, %s197
    %p209 = scmp.eq.s32.totalorder %s21, 1
    %p210 = por %p208, %p209
    %p212 = scmp.ne.s32.totalorder %s197, %s211
    %p213 = scmp.eq.s32.totalorder %s21, 0
    %p214 = por %p212, %p213
    %s216 = sadd.s32 %s215, 1
    %p219 = scmp.eq.s32.totalorder %s15, 1
    %p220 = scmp.ne.s32.totalorder %s215, %s217
    %p221 = scmp.eq.s32.totalorder %s15, 0
    %p222 = por %p220, %p221
    %p223 = scmp.ne.s32.totalorder %s215, %s217
    %p224 = scmp.eq.s32.totalorder %s20, 1
    %p225 = por %p223, %p224
    %p226 = scmp.ne.s32.totalorder %s217, %s218
    %p227 = scmp.eq.s32.totalorder %s20, 0
    %p228 = por %p226, %p227
    %p229 = scmp.ne.s32.totalorder %s217, %s218
    %p230 = scmp.eq.s32.totalorder %s21, 1
    %p231 = por %p229, %p230
    %p233 = scmp.ne.s32.totalorder %s218, %s232
    %p234 = scmp.eq.s32.totalorder %s21, 0
    %p235 = por %p233, %p234
    %s236 = ssub.s32 %s22, %s34
    %s237 = ssub.s32 %s23, %s30
    %s238 = sor.u32 %s236, %s237
    %p239 = scmp.eq.s32.totalorder %s238, 0
    %s241 = sadd.s32 %s240, 1
    %s242 = scalar_select %p239, %s240, %s241
    %p245 = pneg %p239
    %p246 = scmp.eq.s32.totalorder %s15, 1
    %p247 = por %p245, %p246
    %p248 = scmp.ne.s32.totalorder %s240, %s243
    %p249 = scmp.eq.s32.totalorder %s15, 0
    %p250 = por %p248, %p249
    %p251 = scmp.ne.s32.totalorder %s240, %s243
    %p252 = scmp.eq.s32.totalorder %s20, 1
    %p253 = por %p251, %p252
    %p254 = scmp.ne.s32.totalorder %s243, %s244
    %p255 = scmp.eq.s32.totalorder %s20, 0
    %p256 = por %p254, %p255
    %p257 = scmp.ne.s32.totalorder %s243, %s244
    %p258 = scmp.eq.s32.totalorder %s21, 1
    %p259 = por %p257, %p258
    %p261 = scmp.ne.s32.totalorder %s244, %s260
    %p262 = scmp.eq.s32.totalorder %s21, 0
    %p263 = por %p261, %p262
    %p264 = scmp.le.s32.totalorder 1, %s15
    %p265 = scmp.lt.s32.totalorder %s15, 3
    %p266 = pnand %p264, %p265
    %p267 = pneg %p266
    // Predicated region
    $region9: #{tpu_custom_call.1} parent=5 // pred_check
      _
    $region10: #{tpu_custom_call.1} parent=5 // pred_check_branch
      %269 = sbr.rel (%p266) target = $region12
    $region11: #{tpu_custom_call.1} parent=5 // pred_region
      %s270 = ssub.s32 %s15, 1
      // Predicated region
      $region13: #{tpu_custom_call.1} parent=11 // pred_check
        %p271 = pneg %p102
      $region14: #{tpu_custom_call.1} parent=11 // pred_check_branch
        %273 = sbr.rel (%p271) target = $region16
      $region15: #{tpu_custom_call.1} parent=11 // pred_region
        _
      $region16: #{tpu_custom_call.1} parent=11 // pred_fallthru
        _
      // Predicated region
      $region17: #{tpu_custom_call.1} parent=11 // pred_check
        %p274 = pneg %p123
      $region18: #{tpu_custom_call.1} parent=11 // pred_check_branch
        %276 = sbr.rel (%p274) target = $region20
      $region19: #{tpu_custom_call.1} parent=11 // pred_region
        _
      $region20: #{tpu_custom_call.1} parent=11 // pred_fallthru
        _
      // Predicated region
      $region21: #{tpu_custom_call.1} parent=11 // pred_check
        %p277 = pneg %p144
      $region22: #{tpu_custom_call.1} parent=11 // pred_check_branch
        %279 = sbr.rel (%p277) target = $region24
      $region23: #{tpu_custom_call.1} parent=11 // pred_region
        _
      $region24: #{tpu_custom_call.1} parent=11 // pred_fallthru
        _
      // Predicated region
      $region25: #{tpu_custom_call.1} parent=11 // pred_check
        %p280 = pneg %p165
      $region26: #{tpu_custom_call.1} parent=11 // pred_check_branch
        %282 = sbr.rel (%p280) target = $region28
      $region27: #{tpu_custom_call.1} parent=11 // pred_region
        _
      $region28: #{tpu_custom_call.1} parent=11 // pred_fallthru
        _
      // Predicated region
      $region29: #{tpu_custom_call.1} parent=11 // pred_check
        %p283 = pneg %p186
      $region30: #{tpu_custom_call.1} parent=11 // pred_check_branch
        %285 = sbr.rel (%p283) target = $region32
      $region31: #{tpu_custom_call.1} parent=11 // pred_region
        _
      $region32: #{tpu_custom_call.1} parent=11 // pred_fallthru
        _
      // Predicated region
      $region33: #{tpu_custom_call.1} parent=11 // pred_check
        %p286 = pneg %p207
      $region34: #{tpu_custom_call.1} parent=11 // pred_check_branch
        %288 = sbr.rel (%p286) target = $region36
      $region35: #{tpu_custom_call.1} parent=11 // pred_region
        _
      $region36: #{tpu_custom_call.1} parent=11 // pred_fallthru
        _
      // Predicated region
      $region37: #{tpu_custom_call.1} parent=11 // pred_check
        %p289 = pneg %p228
      $region38: #{tpu_custom_call.1} parent=11 // pred_check_branch
        %291 = sbr.rel (%p289) target = $region40
      $region39: #{tpu_custom_call.1} parent=11 // pred_region
        _
      $region40: #{tpu_custom_call.1} parent=11 // pred_fallthru
        _
    $region12: #{tpu_custom_call.1} parent=5 // pred_fallthru
      _
    %p292 = scmp.lt.s32.totalorder %s15, 2
    // Predicated region
    $region41: #{tpu_custom_call.1} parent=5 // pred_check
      %p293 = pneg %p292
    $region42: #{tpu_custom_call.1} parent=5 // pred_check_branch
      %295 = sbr.rel (%p293) target = $region44
    $region43: #{tpu_custom_call.1} parent=5 // pred_region
      // Predicated region
      $region45: #{tpu_custom_call.1} parent=43 // pred_check
        %p296 = pneg %p49
      $region46: #{tpu_custom_call.1} parent=43 // pred_check_branch
        %298 = sbr.rel (%p296) target = $region48
      $region47: #{tpu_custom_call.1} parent=43 // pred_region
        %p299 = scmp.lt.s32.totalorder %s22, 1
        %s300 = scalar_select %p299, %s22, 1
        %p301 = scmp.lt.s32.totalorder %s23, 0
        %s302 = scalar_select %p301, %s23, 0
        %s303 = smul.addr %s300, 4
        %s304 = sadd.s32 %s302, %s303
        %s305 = smul.addr %s304, 8
        %s306 = scalar_lea.vmem %s0, %s305
      $region48: #{tpu_custom_call.1} parent=43 // pred_fallthru
        _
      // Predicated region
      $region49: #{tpu_custom_call.1} parent=43 // pred_check
        %p307 = pneg %p75
      $region50: #{tpu_custom_call.1} parent=43 // pred_check_branch
        %309 = sbr.rel (%p307) target = $region52
      $region51: #{tpu_custom_call.1} parent=43 // pred_region
        %p310 = scmp.lt.s32.totalorder %s22, 1
        %s311 = scalar_select %p310, %s22, 1
        %s312 = smul.addr %s311, 4
        %s313 = smul.addr %s312, 8
        %s314 = scalar_lea.vmem %s1, %s313
      $region52: #{tpu_custom_call.1} parent=43 // pred_fallthru
        _
    $region44: #{tpu_custom_call.1} parent=5 // pred_fallthru
      _
    %p315 = scmp.le.s32.totalorder 1, %s15
    %p316 = scmp.lt.s32.totalorder %s15, 3
    %p317 = pnand %p315, %p316
    %p318 = pneg %p317
    // Predicated region
    $region53: #{tpu_custom_call.1} parent=5 // pred_check
      _
    $region54: #{tpu_custom_call.1} parent=5 // pred_check_branch
      %320 = sbr.rel (%p317) target = $region56
    $region55: #{tpu_custom_call.1} parent=5 // pred_region
      %s321 = ssub.s32 %s15, 1
      %p322 = scmp.lt.s32.totalorder %s24, 1
      %s323 = scalar_select %p322, %s24, 1
      %p324 = scmp.lt.s32.totalorder %s25, 0
      %s325 = scalar_select %p324, %s25, 0
      %s326 = smul.addr %s323, 4
      %s327 = sadd.s32 %s325, %s326
      %s328 = smul.addr %s327, 8
      %s329 = scalar_lea.vmem %s0, %s328
      %p330 = pneg %p55
      %p331 = pneg %p52
      %p332 = scmp.lt.s32.totalorder %s24, 1
      %s333 = scalar_select %p332, %s24, 1
      %s334 = smul.addr %s333, 4
      %s335 = smul.addr %s334, 8
      %s336 = scalar_lea.vmem %s1, %s335
      %p337 = pneg %p81
      %p338 = pneg %p78
      %p339 = pneg %p102
      %p340 = pneg %p99
      %p341 = pneg %p123
      %p342 = pneg %p120
      %p343 = pneg %p144
      %p344 = pneg %p141
      %p345 = pneg %p165
      %p346 = pneg %p162
      %p347 = pneg %p186
      %p348 = pneg %p183
      %p349 = pneg %p207
      %p350 = pneg %p204
      %p351 = pneg %p228
      %p352 = pneg %p225
      %p353 = pneg %p256
      %p354 = pneg %p253
      %p355 = scmp.lt.s32.totalorder %s24, 1
      %s356 = scalar_select %p355, %s24, 1
      %p357 = scmp.lt.s32.totalorder %s25, 0
      %s358 = scalar_select %p357, %s25, 0
      %s359 = smul.addr %s356, 4
      %s360 = sadd.s32 %s358, %s359
      %s361 = smul.addr %s360, 8
      %s362 = scalar_lea.vmem %s9, %s361
      %p363 = scmp.lt.s32.totalorder %s24, 1
      %s364 = scalar_select %p363, %s24, 1
      %p365 = scmp.lt.s32.totalorder %s25, 0
      %s366 = scalar_select %p365, %s25, 0
      %s367 = smul.addr %s364, 4
      %s368 = sadd.s32 %s366, %s367
      %s369 = smul.addr %s368, 8
      %s370 = scalar_lea.vmem %s0, %s369
      %p371 = scmp.lt.s32.totalorder %s24, 1
      %s372 = scalar_select %p371, %s24, 1
      %s373 = smul.addr %s372, 4
      %s374 = smul.addr %s373, 8
      %s375 = scalar_lea.vmem %s1, %s374
      %p376 = scmp.lt.s32.totalorder %s24, 1
      %s377 = scalar_select %p376, %s24, 1
      %p378 = scmp.lt.s32.totalorder %s25, 0
      %s379 = scalar_select %p378, %s25, 0
      %s380 = smul.addr %s377, 4
      %s381 = sadd.s32 %s379, %s380
      %s382 = smul.addr %s381, 8
      %s383 = scalar_lea.vmem %s9, %s382
      %v385 = vld [vmem:[%s370] sm:$0xff]
      %v386 = vld [vmem:[%s370 + $0x8] sm:$0xff]
      %v387 = vld [vmem:[%s370 + $0x10] sm:$0xff]
      %v388 = vld [vmem:[%s370 + $0x18] sm:$0xff]
      %v389 = vpack.c.bf16 %v386, %v385
      %v390 = vpack.c.bf16 %v388, %v387
      %v391 = vld [vmem:[%s375] sm:$0xff]
      %v392 = vld [vmem:[%s375 + $0x8] sm:$0xff]
      %v393 = vld [vmem:[%s375 + $0x10] sm:$0xff]
      %v394 = vld [vmem:[%s375 + $0x18] sm:$0xff]
      %v395 = vpack.c.bf16 %v392, %v391
      %v396 = vpack.c.bf16 %v394, %v393
      %v397 = vld [vmem:[%s2] sm:$0xff]
      %v398 = vld [vmem:[%s2 + $0x8] sm:$0xff]
      %v399 = vld [vmem:[%s2 + $0x10] sm:$0xff]
      %v400 = vld [vmem:[%s2 + $0x18] sm:$0xff]
      %v401 = vpack.c.bf16 %v398, %v397
      %v402 = vpack.c.bf16 %v400, %v399
      %v403 = vld [vmem:[%s3] sm:$0xff]
      %v404 = vld [vmem:[%s3 + $0x8] sm:$0xff]
      %v405 = vld [vmem:[%s3 + $0x10] sm:$0xff]
      %v406 = vld [vmem:[%s3 + $0x18] sm:$0xff]
      %v407 = vpack.c.bf16 %v404, %v403
      %v408 = vpack.c.bf16 %v406, %v405
      %v409 = vld [vmem:[%s4] sm:$0xff]
      %v410 = vld [vmem:[%s4 + $0x8] sm:$0xff]
      %v411 = vld [vmem:[%s4 + $0x10] sm:$0xff]
      %v412 = vld [vmem:[%s4 + $0x18] sm:$0xff]
      %v413 = vpack.c.bf16 %v410, %v409
      %v414 = vpack.c.bf16 %v412, %v411
      %v415 = vld [vmem:[%s6] sm:$0xff]
      %v416 = vld [vmem:[%s6 + $0x8] sm:$0xff]
      %v417 = vld [vmem:[%s6 + $0x10] sm:$0xff]
      %v418 = vld [vmem:[%s6 + $0x18] sm:$0xff]
      %420 = vset.pattern.permute.xlu0 0
      %421 = vperm.xlu0 %420, %v415
      %v422 = vpop.permute.xlu0 %421
      %425 = vset.pattern.permute.xlu0 0
      %426 = vperm.xlu0 %425, %v416
      %v427 = vpop.permute.xlu0 %426
      %430 = vset.pattern.permute.xlu0 0
      %431 = vperm.xlu0 %430, %v417
      %v432 = vpop.permute.xlu0 %431
      %435 = vset.pattern.permute.xlu0 0
      %436 = vperm.xlu0 %435, %v418
      %v437 = vpop.permute.xlu0 %436
      %vm439 = vcmask 261120
      %v441 = vsel %vm439, %v401, 0
      %v444 = vsel %vm439, %v402, 0
      %446 = vmatpush.bf16.msra.mxu0 0
      %447 = vmatpush.bf16.msra.mxu0 0
      %448 = vmatpush.bf16.msra.mxu0 0
      %449 = vmatpush.bf16.msra.mxu0 0
      %450 = vmatpush.bf16.msra.mxu0 0
      %451 = vmatpush.bf16.msra.mxu0 0
      %452 = vmatpush.bf16.msra.mxu0 %v390
      %453 = vmatpush.bf16.msra.mxu0 %v389
      %454 = vmatmul.bf16.gmra.mxu0 %v441
      %v455 = vpop.f32.mrf.mxu0
      %v456 = vadd.f32 %v422, %v455
      %v457 = vpop.f32.mrf.mxu0
      %v458 = vadd.f32 %v427, %v457
      %459 = vmatmul.bf16.gmra.mxu0 %v444
      %v460 = vpop.f32.mrf.mxu0
      %v461 = vadd.f32 %v432, %v460
      %v462 = vpop.f32.mrf.mxu0
      %v463 = vadd.f32 %v437, %v462
      %464 = vdwg.mxu0
      %v466 = vsel %vm439, %v407, 0
      %v469 = vsel %vm439, %v408, 0
      %471 = vmatpush.bf16.msra.mxu0 0
      %472 = vmatpush.bf16.msra.mxu0 0
      %473 = vmatpush.bf16.msra.mxu0 0
      %474 = vmatpush.bf16.msra.mxu0 0
      %475 = vmatpush.bf16.msra.mxu0 0
      %476 = vmatpush.bf16.msra.mxu0 0
      %477 = vmatpush.bf16.msra.mxu0 %v396
      %478 = vmatpush.bf16.msra.mxu0 %v395
      %479 = vmatmul.bf16.gmra.mxu0 %v466
      %v480 = vpop.f32.mrf.mxu0
      %v481 = vadd.f32 0.0, %v480
      %v482 = vpop.f32.mrf.mxu0
      %v483 = vadd.f32 0.0, %v482
      %484 = vmatmul.bf16.gmra.mxu0 %v469
      %v485 = vpop.f32.mrf.mxu0
      %v486 = vadd.f32 0.0, %v485
      %v487 = vpop.f32.mrf.mxu0
      %v488 = vadd.f32 0.0, %v487
      %489 = vdwg.mxu0
      %v490 = vld [vmem:[%s7] sm:$0xff]
      %v491 = vld [vmem:[%s7 + $0x8] sm:$0xff]
      %v492 = vld [vmem:[%s7 + $0x10] sm:$0xff]
      %v493 = vld [vmem:[%s7 + $0x18] sm:$0xff]
      %495 = vset.pattern.permute.xlu0 0
      %496 = vperm.xlu0 %495, %v490
      %v497 = vpop.permute.xlu0 %496
      %500 = vset.pattern.permute.xlu0 0
      %501 = vperm.xlu0 %500, %v491
      %v502 = vpop.permute.xlu0 %501
      %505 = vset.pattern.permute.xlu0 0
      %506 = vperm.xlu0 %505, %v492
      %v507 = vpop.permute.xlu0 %506
      %510 = vset.pattern.permute.xlu0 0
      %511 = vperm.xlu0 %510, %v493
      %v512 = vpop.permute.xlu0 %511
      %v515 = vsel %vm439, %v413, 0
      %v518 = vsel %vm439, %v414, 0
      %520 = vmatpush.bf16.msra.mxu0 0
      %521 = vmatpush.bf16.msra.mxu0 0
      %522 = vmatpush.bf16.msra.mxu0 0
      %523 = vmatpush.bf16.msra.mxu0 0
      %524 = vmatpush.bf16.msra.mxu0 0
      %525 = vmatpush.bf16.msra.mxu0 0
      %526 = vmatpush.bf16.msra.mxu0 %v396
      %527 = vmatpush.bf16.msra.mxu0 %v395
      %528 = vmatmul.bf16.gmra.mxu0 %v515
      %v529 = vpop.f32.mrf.mxu0
      %v530 = vadd.f32 %v497, %v529
      %v531 = vpop.f32.mrf.mxu0
      %v532 = vadd.f32 %v502, %v531
      %533 = vmatmul.bf16.gmra.mxu0 %v518
      %v534 = vpop.f32.mrf.mxu0
      %v535 = vadd.f32 %v507, %v534
      %v536 = vpop.f32.mrf.mxu0
      %v537 = vadd.f32 %v512, %v536
      %538 = vdwg.mxu0
      %v539 = vmul.f32 %v456, 0.5
      %v540 = vmul.f32 %v458, 0.5
      %v541 = vmul.f32 %v461, 0.5
      %v542 = vmul.f32 %v463, 0.5
      %v547 = vrot.slane %v539, 4
      %v548 = vrot.slane %v540, 4
      %v549 = vrot.slane %v541, 4
      %v550 = vrot.slane %v542, 4
      %v559 = vrot.slane %v481, 4
      %v560 = vrot.slane %v483, 4
      %v561 = vrot.slane %v486, 4
      %v562 = vrot.slane %v488, 4
      %v567 = vpack.c.bf16 %v481, %v481
      %v568 = vpack.c.bf16 %v559, %v559
      %v569 = vpack.c.bf16 %v483, %v483
      %v570 = vpack.c.bf16 %v560, %v560
      %v571 = vpack.c.bf16 %v486, %v486
      %v572 = vpack.c.bf16 %v561, %v561
      %v573 = vpack.c.bf16 %v488, %v488
      %v574 = vpack.c.bf16 %v562, %v562
      %v579 = vrot.slane %v530, 4
      %v580 = vrot.slane %v532, 4
      %v581 = vrot.slane %v535, 4
      %v582 = vrot.slane %v537, 4
      %v587 = vpack.c.bf16 %v530, %v530
      %v588 = vpack.c.bf16 %v579, %v579
      %v589 = vpack.c.bf16 %v532, %v532
      %v590 = vpack.c.bf16 %v580, %v580
      %v591 = vpack.c.bf16 %v535, %v535
      %v592 = vpack.c.bf16 %v581, %v581
      %v593 = vpack.c.bf16 %v537, %v537
      %v594 = vpack.c.bf16 %v582, %v582
      %595 = vxpose.xlu0.b32.start [1/16] %v539, 128
      %596 = vxpose.xlu0.b32.cont [2/16] 0.0, 128
      %597 = vxpose.xlu0.b32.cont [3/16] 0.0, 128
      %598 = vxpose.xlu0.b32.cont [4/16] 0.0, 128
      %599 = vxpose.xlu0.b32.cont [5/16] 0.0, 128
      %600 = vxpose.xlu0.b32.cont [6/16] 0.0, 128
      %601 = vxpose.xlu0.b32.cont [7/16] 0.0, 128
      %602 = vxpose.xlu0.b32.cont [8/16] 0.0, 128
      %603 = vxpose.xlu0.b32.cont [9/16] 0.0, 128
      %604 = vxpose.xlu0.b32.cont [10/16] 0.0, 128
      %605 = vxpose.xlu0.b32.cont [11/16] 0.0, 128
      %606 = vxpose.xlu0.b32.cont [12/16] 0.0, 128
      %607 = vxpose.xlu0.b32.cont [13/16] 0.0, 128
      %608 = vxpose.xlu0.b32.cont [14/16] 0.0, 128
      %609 = vxpose.xlu0.b32.cont [15/16] 0.0, 128
      %610 = vxpose.xlu0.b32.end [16/16] 0.0, 128
      %v611 = vpop.trf.xlu0
      %v612 = vpop.trf.xlu0
      %v613 = vpop.trf.xlu0
      %v614 = vpop.trf.xlu0
      %v615 = vpop.trf.xlu0
      %v616 = vpop.trf.xlu0
      %v617 = vpop.trf.xlu0
      %v618 = vpop.trf.xlu0
      %v619 = vpop.trf.xlu0
      %v620 = vpop.trf.xlu0
      %v621 = vpop.trf.xlu0
      %v622 = vpop.trf.xlu0
      %v623 = vpop.trf.xlu0
      %v624 = vpop.trf.xlu0
      %v625 = vpop.trf.xlu0
      %v626 = vpop.trf.xlu0
      %627 = vxpose.xlu0.b32.start [1/16] %v547, 128
      %628 = vxpose.xlu0.b32.cont [2/16] 0.0, 128
      %629 = vxpose.xlu0.b32.cont [3/16] 0.0, 128
      %630 = vxpose.xlu0.b32.cont [4/16] 0.0, 128
      %631 = vxpose.xlu0.b32.cont [5/16] 0.0, 128
      %632 = vxpose.xlu0.b32.cont [6/16] 0.0, 128
      %633 = vxpose.xlu0.b32.cont [7/16] 0.0, 128
      %634 = vxpose.xlu0.b32.cont [8/16] 0.0, 128
      %635 = vxpose.xlu0.b32.cont [9/16] 0.0, 128
      %636 = vxpose.xlu0.b32.cont [10/16] 0.0, 128
      %637 = vxpose.xlu0.b32.cont [11/16] 0.0, 128
      %638 = vxpose.xlu0.b32.cont [12/16] 0.0, 128
      %639 = vxpose.xlu0.b32.cont [13/16] 0.0, 128
      %640 = vxpose.xlu0.b32.cont [14/16] 0.0, 128
      %641 = vxpose.xlu0.b32.cont [15/16] 0.0, 128
      %642 = vxpose.xlu0.b32.end [16/16] 0.0, 128
      %v643 = vpop.trf.xlu0
      %v644 = vpop.trf.xlu0
      %v645 = vpop.trf.xlu0
      %v646 = vpop.trf.xlu0
      %v647 = vpop.trf.xlu0
      %v648 = vpop.trf.xlu0
      %v649 = vpop.trf.xlu0
      %v650 = vpop.trf.xlu0
      %v651 = vpop.trf.xlu0
      %v652 = vpop.trf.xlu0
      %v653 = vpop.trf.xlu0
      %v654 = vpop.trf.xlu0
      %v655 = vpop.trf.xlu0
      %v656 = vpop.trf.xlu0
      %v657 = vpop.trf.xlu0
      %v658 = vpop.trf.xlu0
      %659 = vxpose.xlu0.b32.start [1/16] %v540, 128
      %660 = vxpose.xlu0.b32.cont [2/16] 0.0, 128
      %661 = vxpose.xlu0.b32.cont [3/16] 0.0, 128
      %662 = vxpose.xlu0.b32.cont [4/16] 0.0, 128
      %663 = vxpose.xlu0.b32.cont [5/16] 0.0, 128
      %664 = vxpose.xlu0.b32.cont [6/16] 0.0, 128
      %665 = vxpose.xlu0.b32.cont [7/16] 0.0, 128
      %666 = vxpose.xlu0.b32.cont [8/16] 0.0, 128
      %667 = vxpose.xlu0.b32.cont [9/16] 0.0, 128
      %668 = vxpose.xlu0.b32.cont [10/16] 0.0, 128
      %669 = vxpose.xlu0.b32.cont [11/16] 0.0, 128
      %670 = vxpose.xlu0.b32.cont [12/16] 0.0, 128
      %671 = vxpose.xlu0.b32.cont [13/16] 0.0, 128
      %672 = vxpose.xlu0.b32.cont [14/16] 0.0, 128
      %673 = vxpose.xlu0.b32.cont [15/16] 0.0, 128
      %674 = vxpose.xlu0.b32.end [16/16] 0.0, 128
      %v675 = vpop.trf.xlu0
      %v676 = vpop.trf.xlu0
      %v677 = vpop.trf.xlu0
      %v678 = vpop.trf.xlu0
      %v679 = vpop.trf.xlu0
      %v680 = vpop.trf.xlu0
      %v681 = vpop.trf.xlu0
      %v682 = vpop.trf.xlu0
      %v683 = vpop.trf.xlu0
      %v684 = vpop.trf.xlu0
      %v685 = vpop.trf.xlu0
      %v686 = vpop.trf.xlu0
      %v687 = vpop.trf.xlu0
      %v688 = vpop.trf.xlu0
      %v689 = vpop.trf.xlu0
      %v690 = vpop.trf.xlu0
      %691 = vxpose.xlu0.b32.start [1/16] %v548, 128
      %692 = vxpose.xlu0.b32.cont [2/16] 0.0, 128
      %693 = vxpose.xlu0.b32.cont [3/16] 0.0, 128
      %694 = vxpose.xlu0.b32.cont [4/16] 0.0, 128
      %695 = vxpose.xlu0.b32.cont [5/16] 0.0, 128
      %696 = vxpose.xlu0.b32.cont [6/16] 0.0, 128
      %697 = vxpose.xlu0.b32.cont [7/16] 0.0, 128
      %698 = vxpose.xlu0.b32.cont [8/16] 0.0, 128
      %699 = vxpose.xlu0.b32.cont [9/16] 0.0, 128
      %700 = vxpose.xlu0.b32.cont [10/16] 0.0, 128
      %701 = vxpose.xlu0.b32.cont [11/16] 0.0, 128
      %702 = vxpose.xlu0.b32.cont [12/16] 0.0, 128
      %703 = vxpose.xlu0.b32.cont [13/16] 0.0, 128
      %704 = vxpose.xlu0.b32.cont [14/16] 0.0, 128
      %705 = vxpose.xlu0.b32.cont [15/16] 0.0, 128
      %706 = vxpose.xlu0.b32.end [16/16] 0.0, 128
      %v707 = vpop.trf.xlu0
      %v708 = vpop.trf.xlu0
      %v709 = vpop.trf.xlu0
      %v710 = vpop.trf.xlu0
      %v711 = vpop.trf.xlu0
      %v712 = vpop.trf.xlu0
      %v713 = vpop.trf.xlu0
      %v714 = vpop.trf.xlu0
      %v715 = vpop.trf.xlu0
      %v716 = vpop.trf.xlu0
      %v717 = vpop.trf.xlu0
      %v718 = vpop.trf.xlu0
      %v719 = vpop.trf.xlu0
      %v720 = vpop.trf.xlu0
      %v721 = vpop.trf.xlu0
      %v722 = vpop.trf.xlu0
      %723 = vxpose.xlu0.b32.start [1/16] %v541, 128
      %724 = vxpose.xlu0.b32.cont [2/16] 0.0, 128
      %725 = vxpose.xlu0.b32.cont [3/16] 0.0, 128
      %726 = vxpose.xlu0.b32.cont [4/16] 0.0, 128
      %727 = vxpose.xlu0.b32.cont [5/16] 0.0, 128
      %728 = vxpose.xlu0.b32.cont [6/16] 0.0, 128
      %729 = vxpose.xlu0.b32.cont [7/16] 0.0, 128
      %730 = vxpose.xlu0.b32.cont [8/16] 0.0, 128
      %731 = vxpose.xlu0.b32.cont [9/16] 0.0, 128
      %732 = vxpose.xlu0.b32.cont [10/16] 0.0, 128
      %733 = vxpose.xlu0.b32.cont [11/16] 0.0, 128
      %734 = vxpose.xlu0.b32.cont [12/16] 0.0, 128
      %735 = vxpose.xlu0.b32.cont [13/16] 0.0, 128
      %736 = vxpose.xlu0.b32.cont [14/16] 0.0, 128
      %737 = vxpose.xlu0.b32.cont [15/16] 0.0, 128
      %738 = vxpose.xlu0.b32.end [16/16] 0.0, 128
      %v739 = vpop.trf.xlu0
      %v740 = vpop.trf.xlu0
      %v741 = vpop.trf.xlu0
      %v742 = vpop.trf.xlu0
      %v743 = vpop.trf.xlu0
      %v744 = vpop.trf.xlu0
      %v745 = vpop.trf.xlu0
      %v746 = vpop.trf.xlu0
      %v747 = vpop.trf.xlu0
      %v748 = vpop.trf.xlu0
      %v749 = vpop.trf.xlu0
      %v750 = vpop.trf.xlu0
      %v751 = vpop.trf.xlu0
      %v752 = vpop.trf.xlu0
      %v753 = vpop.trf.xlu0
      %v754 = vpop.trf.xlu0
      %755 = vxpose.xlu0.b32.start [1/16] %v549, 128
      %756 = vxpose.xlu0.b32.cont [2/16] 0.0, 128
      %757 = vxpose.xlu0.b32.cont [3/16] 0.0, 128
      %758 = vxpose.xlu0.b32.cont [4/16] 0.0, 128
      %759 = vxpose.xlu0.b32.cont [5/16] 0.0, 128
      %760 = vxpose.xlu0.b32.cont [6/16] 0.0, 128
      %761 = vxpose.xlu0.b32.cont [7/16] 0.0, 128
      %762 = vxpose.xlu0.b32.cont [8/16] 0.0, 128
      %763 = vxpose.xlu0.b32.cont [9/16] 0.0, 128
      %764 = vxpose.xlu0.b32.cont [10/16] 0.0, 128
      %765 = vxpose.xlu0.b32.cont [11/16] 0.0, 128
      %766 = vxpose.xlu0.b32.cont [12/16] 0.0, 128
      %767 = vxpose.xlu0.b32.cont [13/16] 0.0, 128
      %768 = vxpose.xlu0.b32.cont [14/16] 0.0, 128
      %769 = vxpose.xlu0.b32.cont [15/16] 0.0, 128
      %770 = vxpose.xlu0.b32.end [16/16] 0.0, 128
      %v771 = vpop.trf.xlu0
      %v772 = vpop.trf.xlu0
      %v773 = vpop.trf.xlu0
      %v774 = vpop.trf.xlu0
      %v775 = vpop.trf.xlu0
      %v776 = vpop.trf.xlu0
      %v777 = vpop.trf.xlu0
      %v778 = vpop.trf.xlu0
      %v779 = vpop.trf.xlu0
      %v780 = vpop.trf.xlu0
      %v781 = vpop.trf.xlu0
      %v782 = vpop.trf.xlu0
      %v783 = vpop.trf.xlu0
      %v784 = vpop.trf.xlu0
      %v785 = vpop.trf.xlu0
      %v786 = vpop.trf.xlu0
      %787 = vxpose.xlu0.b32.start [1/16] %v542, 128
      %788 = vxpose.xlu0.b32.cont [2/16] 0.0, 128
      %789 = vxpose.xlu0.b32.cont [3/16] 0.0, 128
      %790 = vxpose.xlu0.b32.cont [4/16] 0.0, 128
      %791 = vxpose.xlu0.b32.cont [5/16] 0.0, 128
      %792 = vxpose.xlu0.b32.cont [6/16] 0.0, 128
      %793 = vxpose.xlu0.b32.cont [7/16] 0.0, 128
      %794 = vxpose.xlu0.b32.cont [8/16] 0.0, 128
      %795 = vxpose.xlu0.b32.cont [9/16] 0.0, 128
      %796 = vxpose.xlu0.b32.cont [10/16] 0.0, 128
      %797 = vxpose.xlu0.b32.cont [11/16] 0.0, 128
      %798 = vxpose.xlu0.b32.cont [12/16] 0.0, 128
      %799 = vxpose.xlu0.b32.cont [13/16] 0.0, 128
      %800 = vxpose.xlu0.b32.cont [14/16] 0.0, 128
      %801 = vxpose.xlu0.b32.cont [15/16] 0.0, 128
      %802 = vxpose.xlu0.b32.end [16/16] 0.0, 128
      %v803 = vpop.trf.xlu0
      %v804 = vpop.trf.xlu0
      %v805 = vpop.trf.xlu0
      %v806 = vpop.trf.xlu0
      %v807 = vpop.trf.xlu0
      %v808 = vpop.trf.xlu0
      %v809 = vpop.trf.xlu0
      %v810 = vpop.trf.xlu0
      %v811 = vpop.trf.xlu0
      %v812 = vpop.trf.xlu0
      %v813 = vpop.trf.xlu0
      %v814 = vpop.trf.xlu0
      %v815 = vpop.trf.xlu0
      %v816 = vpop.trf.xlu0
      %v817 = vpop.trf.xlu0
      %v818 = vpop.trf.xlu0
      %819 = vxpose.xlu0.b32.start [1/16] %v550, 128
      %820 = vxpose.xlu0.b32.cont [2/16] 0.0, 128
      %821 = vxpose.xlu0.b32.cont [3/16] 0.0, 128
      %822 = vxpose.xlu0.b32.cont [4/16] 0.0, 128
      %823 = vxpose.xlu0.b32.cont [5/16] 0.0, 128
      %824 = vxpose.xlu0.b32.cont [6/16] 0.0, 128
      %825 = vxpose.xlu0.b32.cont [7/16] 0.0, 128
      %826 = vxpose.xlu0.b32.cont [8/16] 0.0, 128
      %827 = vxpose.xlu0.b32.cont [9/16] 0.0, 128
      %828 = vxpose.xlu0.b32.cont [10/16] 0.0, 128
      %829 = vxpose.xlu0.b32.cont [11/16] 0.0, 128
      %830 = vxpose.xlu0.b32.cont [12/16] 0.0, 128
      %831 = vxpose.xlu0.b32.cont [13/16] 0.0, 128
      %832 = vxpose.xlu0.b32.cont [14/16] 0.0, 128
      %833 = vxpose.xlu0.b32.cont [15/16] 0.0, 128
      %834 = vxpose.xlu0.b32.end [16/16] 0.0, 128
      %v835 = vpop.trf.xlu0
      %v836 = vpop.trf.xlu0
      %v837 = vpop.trf.xlu0
      %v838 = vpop.trf.xlu0
      %v839 = vpop.trf.xlu0
      %v840 = vpop.trf.xlu0
      %v841 = vpop.trf.xlu0
      %v842 = vpop.trf.xlu0
      %v843 = vpop.trf.xlu0
      %v844 = vpop.trf.xlu0
      %v845 = vpop.trf.xlu0
      %v846 = vpop.trf.xlu0
      %v847 = vpop.trf.xlu0
      %v848 = vpop.trf.xlu0
      %v849 = vpop.trf.xlu0
      %v850 = vpop.trf.xlu0
      %v851 = vpack.c.bf16 %v611, %v611
      %v852 = vpack.c.bf16 %v612, %v612
      %v853 = vpack.c.bf16 %v643, %v643
      %v854 = vpack.c.bf16 %v644, %v644
      %v855 = vpack.c.bf16 %v675, %v675
      %v856 = vpack.c.bf16 %v676, %v676
      %v857 = vpack.c.bf16 %v707, %v707
      %v858 = vpack.c.bf16 %v708, %v708
      %v859 = vpack.c.bf16 %v739, %v739
      %v860 = vpack.c.bf16 %v740, %v740
      %v861 = vpack.c.bf16 %v771, %v771
      %v862 = vpack.c.bf16 %v772, %v772
      %v863 = vpack.c.bf16 %v803, %v803
      %v864 = vpack.c.bf16 %v804, %v804
      %v865 = vpack.c.bf16 %v835, %v835
      %v866 = vpack.c.bf16 %v836, %v836
      %v869 = vunpack.c.l.b16 %v851
      %v870 = vunpack.c.l.b16 %v852
      %v871 = vpack.c.b16 %v870, %v869
      %vm872 = vcmask 31744
      %v874 = vsel %vm872, %v871, 0
      %vm876 = vcmask 1041408
      %v878 = vsel %vm876, %v567, 0
      %880 = vmatpush.bf16.msra.mxu0 0
      %881 = vmatpush.bf16.msra.mxu0 0
      %882 = vmatpush.bf16.msra.mxu0 0
      %883 = vmatpush.bf16.msra.mxu0 0
      %884 = vmatpush.bf16.msra.mxu0 0
      %885 = vmatpush.bf16.msra.mxu0 0
      %886 = vmatpush.bf16.msra.mxu0 0
      %887 = vmatpush.bf16.msra.mxu0 %v878
      %888 = vmatmul.bf16.gmra.mxu0 %v874
      %v889 = vpop.f32.mrf.mxu0
      %v890 = vadd.f32 0.0, %v889
      %v891 = vpop.f32.mrf.mxu0
      %v892 = vadd.f32 0.0, %v891
      %893 = vdwg.mxu0
      %v896 = vunpack.c.l.b16 %v853
      %v897 = vunpack.c.l.b16 %v854
      %v898 = vpack.c.b16 %v897, %v896
      %v900 = vsel %vm872, %v898, 0
      %v903 = vsel %vm876, %v568, 0
      %905 = vmatpush.bf16.msra.mxu0 0
      %906 = vmatpush.bf16.msra.mxu0 0
      %907 = vmatpush.bf16.msra.mxu0 0
      %908 = vmatpush.bf16.msra.mxu0 0
      %909 = vmatpush.bf16.msra.mxu0 0
      %910 = vmatpush.bf16.msra.mxu0 0
      %911 = vmatpush.bf16.msra.mxu0 0
      %912 = vmatpush.bf16.msra.mxu0 %v903
      %913 = vmatmul.bf16.gmra.mxu0 %v900
      %v914 = vpop.f32.mrf.mxu0
      %v915 = vadd.f32 0.0, %v914
      %v916 = vpop.f32.mrf.mxu0
      %v917 = vadd.f32 0.0, %v916
      %918 = vdwg.mxu0
      %v921 = vunpack.c.l.b16 %v855
      %v922 = vunpack.c.l.b16 %v856
      %v923 = vpack.c.b16 %v922, %v921
      %v925 = vsel %vm872, %v923, 0
      %v928 = vsel %vm876, %v569, 0
      %930 = vmatpush.bf16.msra.mxu0 0
      %931 = vmatpush.bf16.msra.mxu0 0
      %932 = vmatpush.bf16.msra.mxu0 0
      %933 = vmatpush.bf16.msra.mxu0 0
      %934 = vmatpush.bf16.msra.mxu0 0
      %935 = vmatpush.bf16.msra.mxu0 0
      %936 = vmatpush.bf16.msra.mxu0 0
      %937 = vmatpush.bf16.msra.mxu0 %v928
      %938 = vmatmul.bf16.gmra.mxu0 %v925
      %v939 = vpop.f32.mrf.mxu0
      %v940 = vadd.f32 0.0, %v939
      %v941 = vpop.f32.mrf.mxu0
      %v942 = vadd.f32 0.0, %v941
      %943 = vdwg.mxu0
      %v946 = vunpack.c.l.b16 %v857
      %v947 = vunpack.c.l.b16 %v858
      %v948 = vpack.c.b16 %v947, %v946
      %v950 = vsel %vm872, %v948, 0
      %v953 = vsel %vm876, %v570, 0
      %955 = vmatpush.bf16.msra.mxu0 0
      %956 = vmatpush.bf16.msra.mxu0 0
      %957 = vmatpush.bf16.msra.mxu0 0
      %958 = vmatpush.bf16.msra.mxu0 0
      %959 = vmatpush.bf16.msra.mxu0 0
      %960 = vmatpush.bf16.msra.mxu0 0
      %961 = vmatpush.bf16.msra.mxu0 0
      %962 = vmatpush.bf16.msra.mxu0 %v953
      %963 = vmatmul.bf16.gmra.mxu0 %v950
      %v964 = vpop.f32.mrf.mxu0
      %v965 = vadd.f32 0.0, %v964
      %v966 = vpop.f32.mrf.mxu0
      %v967 = vadd.f32 0.0, %v966
      %968 = vdwg.mxu0
      %v971 = vunpack.c.l.b16 %v859
      %v972 = vunpack.c.l.b16 %v860
      %v973 = vpack.c.b16 %v972, %v971
      %v975 = vsel %vm872, %v973, 0
      %v978 = vsel %vm876, %v571, 0
      %980 = vmatpush.bf16.msra.mxu0 0
      %981 = vmatpush.bf16.msra.mxu0 0
      %982 = vmatpush.bf16.msra.mxu0 0
      %983 = vmatpush.bf16.msra.mxu0 0
      %984 = vmatpush.bf16.msra.mxu0 0
      %985 = vmatpush.bf16.msra.mxu0 0
      %986 = vmatpush.bf16.msra.mxu0 0
      %987 = vmatpush.bf16.msra.mxu0 %v978
      %988 = vmatmul.bf16.gmra.mxu0 %v975
      %v989 = vpop.f32.mrf.mxu0
      %v990 = vadd.f32 0.0, %v989
      %v991 = vpop.f32.mrf.mxu0
      %v992 = vadd.f32 0.0, %v991
      %993 = vdwg.mxu0
      %v996 = vunpack.c.l.b16 %v861
      %v997 = vunpack.c.l.b16 %v862
      %v998 = vpack.c.b16 %v997, %v996
      %v1000 = vsel %vm872, %v998, 0
      %v1003 = vsel %vm876, %v572, 0
      %1005 = vmatpush.bf16.msra.mxu0 0
      %1006 = vmatpush.bf16.msra.mxu0 0
      %1007 = vmatpush.bf16.msra.mxu0 0
      %1008 = vmatpush.bf16.msra.mxu0 0
      %1009 = vmatpush.bf16.msra.mxu0 0
      %1010 = vmatpush.bf16.msra.mxu0 0
      %1011 = vmatpush.bf16.msra.mxu0 0
      %1012 = vmatpush.bf16.msra.mxu0 %v1003
      %1013 = vmatmul.bf16.gmra.mxu0 %v1000
      %v1014 = vpop.f32.mrf.mxu0
      %v1015 = vadd.f32 0.0, %v1014
      %v1016 = vpop.f32.mrf.mxu0
      %v1017 = vadd.f32 0.0, %v1016
      %1018 = vdwg.mxu0
      %v1021 = vunpack.c.l.b16 %v863
      %v1022 = vunpack.c.l.b16 %v864
      %v1023 = vpack.c.b16 %v1022, %v1021
      %v1025 = vsel %vm872, %v1023, 0
      %v1028 = vsel %vm876, %v573, 0
      %1030 = vmatpush.bf16.msra.mxu0 0
      %1031 = vmatpush.bf16.msra.mxu0 0
      %1032 = vmatpush.bf16.msra.mxu0 0
      %1033 = vmatpush.bf16.msra.mxu0 0
      %1034 = vmatpush.bf16.msra.mxu0 0
      %1035 = vmatpush.bf16.msra.mxu0 0
      %1036 = vmatpush.bf16.msra.mxu0 0
      %1037 = vmatpush.bf16.msra.mxu0 %v1028
      %1038 = vmatmul.bf16.gmra.mxu0 %v1025
      %v1039 = vpop.f32.mrf.mxu0
      %v1040 = vadd.f32 0.0, %v1039
      %v1041 = vpop.f32.mrf.mxu0
      %v1042 = vadd.f32 0.0, %v1041
      %1043 = vdwg.mxu0
      %v1046 = vunpack.c.l.b16 %v865
      %v1047 = vunpack.c.l.b16 %v866
      %v1048 = vpack.c.b16 %v1047, %v1046
      %v1050 = vsel %vm872, %v1048, 0
      %v1053 = vsel %vm876, %v574, 0
      %1055 = vmatpush.bf16.msra.mxu0 0
      %1056 = vmatpush.bf16.msra.mxu0 0
      %1057 = vmatpush.bf16.msra.mxu0 0
      %1058 = vmatpush.bf16.msra.mxu0 0
      %1059 = vmatpush.bf16.msra.mxu0 0
      %1060 = vmatpush.bf16.msra.mxu0 0
      %1061 = vmatpush.bf16.msra.mxu0 0
      %1062 = vmatpush.bf16.msra.mxu0 %v1053
      %1063 = vmatmul.bf16.gmra.mxu0 %v1050
      %v1064 = vpop.f32.mrf.mxu0
      %v1065 = vadd.f32 0.0, %v1064
      %v1066 = vpop.f32.mrf.mxu0
      %v1067 = vadd.f32 0.0, %v1066
      %1068 = vdwg.mxu0
      %vm1069 = vcmask 130048
      %v1070 = vsel %vm1069, %v890, -inf
      %1071 = vmax.xlane.f32.xlu0 %v1070
      %v1072 = vpop.xlane.xlu0 %1071
      %v1073 = vsel %vm1069, %v892, -inf
      %1074 = vmax.xlane.f32.xlu0 %v1073
      %v1075 = vpop.xlane.xlu0 %1074
      %v1076 = vsel %vm1069, %v915, -inf
      %1077 = vmax.xlane.f32.xlu0 %v1076
      %v1078 = vpop.xlane.xlu0 %1077
      %v1079 = vsel %vm1069, %v917, -inf
      %1080 = vmax.xlane.f32.xlu0 %v1079
      %v1081 = vpop.xlane.xlu0 %1080
      %v1082 = vsel %vm1069, %v940, -inf
      %1083 = vmax.xlane.f32.xlu0 %v1082
      %v1084 = vpop.xlane.xlu0 %1083
      %v1085 = vsel %vm1069, %v942, -inf
      %1086 = vmax.xlane.f32.xlu0 %v1085
      %v1087 = vpop.xlane.xlu0 %1086
      %v1088 = vsel %vm1069, %v965, -inf
      %1089 = vmax.xlane.f32.xlu0 %v1088
      %v1090 = vpop.xlane.xlu0 %1089
      %v1091 = vsel %vm1069, %v967, -inf
      %1092 = vmax.xlane.f32.xlu0 %v1091
      %v1093 = vpop.xlane.xlu0 %1092
      %v1094 = vsel %vm1069, %v990, -inf
      %1095 = vmax.xlane.f32.xlu0 %v1094
      %v1096 = vpop.xlane.xlu0 %1095
      %v1097 = vsel %vm1069, %v992, -inf
      %1098 = vmax.xlane.f32.xlu0 %v1097
      %v1099 = vpop.xlane.xlu0 %1098
      %v1100 = vsel %vm1069, %v1015, -inf
      %1101 = vmax.xlane.f32.xlu0 %v1100
      %v1102 = vpop.xlane.xlu0 %1101
      %v1103 = vsel %vm1069, %v1017, -inf
      %1104 = vmax.xlane.f32.xlu0 %v1103
      %v1105 = vpop.xlane.xlu0 %1104
      %v1106 = vsel %vm1069, %v1040, -inf
      %1107 = vmax.xlane.f32.xlu0 %v1106
      %v1108 = vpop.xlane.xlu0 %1107
      %v1109 = vsel %vm1069, %v1042, -inf
      %1110 = vmax.xlane.f32.xlu0 %v1109
      %v1111 = vpop.xlane.xlu0 %1110
      %v1112 = vsel %vm1069, %v1065, -inf
      %1113 = vmax.xlane.f32.xlu0 %v1112
      %v1114 = vpop.xlane.xlu0 %1113
      %v1115 = vsel %vm1069, %v1067, -inf
      %1116 = vmax.xlane.f32.xlu0 %v1115
      %v1117 = vpop.xlane.xlu0 %1116
      %v1118 = vsub.f32 %v890, %v1072
      %v1119 = vsub.f32 %v892, %v1075
      %v1120 = vsub.f32 %v915, %v1078
      %v1121 = vsub.f32 %v917, %v1081
      %v1122 = vsub.f32 %v940, %v1084
      %v1123 = vsub.f32 %v942, %v1087
      %v1124 = vsub.f32 %v965, %v1090
      %v1125 = vsub.f32 %v967, %v1093
      %v1126 = vsub.f32 %v990, %v1096
      %v1127 = vsub.f32 %v992, %v1099
      %v1128 = vsub.f32 %v1015, %v1102
      %v1129 = vsub.f32 %v1017, %v1105
      %v1130 = vsub.f32 %v1040, %v1108
      %v1131 = vsub.f32 %v1042, %v1111
      %v1132 = vsub.f32 %v1065, %v1114
      %v1133 = vsub.f32 %v1067, %v1117
      %v1134 = vmul.f32 %v1118, 1.442695
      %v1135 = vpow.pop %v1134
      %v1136 = vmul.f32 %v1119, 1.442695
      %v1137 = vpow.pop %v1136
      %v1138 = vmul.f32 %v1120, 1.442695
      %v1139 = vpow.pop %v1138
      %v1140 = vmul.f32 %v1121, 1.442695
      %v1141 = vpow.pop %v1140
      %v1142 = vmul.f32 %v1122, 1.442695
      %v1143 = vpow.pop %v1142
      %v1144 = vmul.f32 %v1123, 1.442695
      %v1145 = vpow.pop %v1144
      %v1146 = vmul.f32 %v1124, 1.442695
      %v1147 = vpow.pop %v1146
      %v1148 = vmul.f32 %v1125, 1.442695
      %v1149 = vpow.pop %v1148
      %v1150 = vmul.f32 %v1126, 1.442695
      %v1151 = vpow.pop %v1150
      %v1152 = vmul.f32 %v1127, 1.442695
      %v1153 = vpow.pop %v1152
      %v1154 = vmul.f32 %v1128, 1.442695
      %v1155 = vpow.pop %v1154
      %v1156 = vmul.f32 %v1129, 1.442695
      %v1157 = vpow.pop %v1156
      %v1158 = vmul.f32 %v1130, 1.442695
      %v1159 = vpow.pop %v1158
      %v1160 = vmul.f32 %v1131, 1.442695
      %v1161 = vpow.pop %v1160
      %v1162 = vmul.f32 %v1132, 1.442695
      %v1163 = vpow.pop %v1162
      %v1164 = vmul.f32 %v1133, 1.442695
      %v1165 = vpow.pop %v1164
      %v1166 = vsel %vm1069, %v1135, 0.0
      %1167 = vadd.xlane.f32.xlu0 %v1166
      %v1168 = vpop.xlane.xlu0 %1167
      %v1169 = vsel %vm1069, %v1137, 0.0
      %1170 = vadd.xlane.f32.xlu0 %v1169
      %v1171 = vpop.xlane.xlu0 %1170
      %v1172 = vsel %vm1069, %v1139, 0.0
      %1173 = vadd.xlane.f32.xlu0 %v1172
      %v1174 = vpop.xlane.xlu0 %1173
      %v1175 = vsel %vm1069, %v1141, 0.0
      %1176 = vadd.xlane.f32.xlu0 %v1175
      %v1177 = vpop.xlane.xlu0 %1176
      %v1178 = vsel %vm1069, %v1143, 0.0
      %1179 = vadd.xlane.f32.xlu0 %v1178
      %v1180 = vpop.xlane.xlu0 %1179
      %v1181 = vsel %vm1069, %v1145, 0.0
      %1182 = vadd.xlane.f32.xlu0 %v1181
      %v1183 = vpop.xlane.xlu0 %1182
      %v1184 = vsel %vm1069, %v1147, 0.0
      %1185 = vadd.xlane.f32.xlu0 %v1184
      %v1186 = vpop.xlane.xlu0 %1185
      %v1187 = vsel %vm1069, %v1149, 0.0
      %1188 = vadd.xlane.f32.xlu0 %v1187
      %v1189 = vpop.xlane.xlu0 %1188
      %v1190 = vsel %vm1069, %v1151, 0.0
      %1191 = vadd.xlane.f32.xlu0 %v1190
      %v1192 = vpop.xlane.xlu0 %1191
      %v1193 = vsel %vm1069, %v1153, 0.0
      %1194 = vadd.xlane.f32.xlu0 %v1193
      %v1195 = vpop.xlane.xlu0 %1194
      %v1196 = vsel %vm1069, %v1155, 0.0
      %1197 = vadd.xlane.f32.xlu0 %v1196
      %v1198 = vpop.xlane.xlu0 %1197
      %v1199 = vsel %vm1069, %v1157, 0.0
      %1200 = vadd.xlane.f32.xlu0 %v1199
      %v1201 = vpop.xlane.xlu0 %1200
      %v1202 = vsel %vm1069, %v1159, 0.0
      %1203 = vadd.xlane.f32.xlu0 %v1202
      %v1204 = vpop.xlane.xlu0 %1203
      %v1205 = vsel %vm1069, %v1161, 0.0
      %1206 = vadd.xlane.f32.xlu0 %v1205
      %v1207 = vpop.xlane.xlu0 %1206
      %v1208 = vsel %vm1069, %v1163, 0.0
      %1209 = vadd.xlane.f32.xlu0 %v1208
      %v1210 = vpop.xlane.xlu0 %1209
      %v1211 = vsel %vm1069, %v1165, 0.0
      %1212 = vadd.xlane.f32.xlu0 %v1211
      %v1213 = vpop.xlane.xlu0 %1212
      %v1214 = vpack.c.bf16 %v1135, %v1135
      %v1215 = vpack.c.bf16 %v1137, %v1137
      %v1216 = vpack.c.bf16 %v1139, %v1139
      %v1217 = vpack.c.bf16 %v1141, %v1141
      %v1218 = vpack.c.bf16 %v1143, %v1143
      %v1219 = vpack.c.bf16 %v1145, %v1145
      %v1220 = vpack.c.bf16 %v1147, %v1147
      %v1221 = vpack.c.bf16 %v1149, %v1149
      %v1222 = vpack.c.bf16 %v1151, %v1151
      %v1223 = vpack.c.bf16 %v1153, %v1153
      %v1224 = vpack.c.bf16 %v1155, %v1155
      %v1225 = vpack.c.bf16 %v1157, %v1157
      %v1226 = vpack.c.bf16 %v1159, %v1159
      %v1227 = vpack.c.bf16 %v1161, %v1161
      %v1228 = vpack.c.bf16 %v1163, %v1163
      %v1229 = vpack.c.bf16 %v1165, %v1165
      %v1232 = vunpack.c.l.b16 %v1214
      %v1233 = vunpack.c.l.b16 %v1215
      %v1234 = vpack.c.b16 %v1233, %v1232
      %v1236 = vsel %vm1069, %v587, 0
      %v1239 = vsel %vm1069, %v1234, 0
      %1241 = vmatpush.bf16.xpose.msra.mxu0 0
      %1242 = vmatpush.bf16.xpose.msra.mxu0 0
      %1243 = vmatpush.bf16.xpose.msra.mxu0 0
      %1244 = vmatpush.bf16.xpose.msra.mxu0 0
      %1245 = vmatpush.bf16.xpose.msra.mxu0 0
      %1246 = vmatpush.bf16.xpose.msra.mxu0 0
      %1247 = vmatpush.bf16.xpose.msra.mxu0 0
      %1248 = vmatpush.bf16.xpose.msra.mxu0 %v1239
      %1249 = vmatmul.bf16.gmra.mxu0 %v1236
      %v1250 = vpop.f32.mrf.mxu0
      %v1251 = vadd.f32 0.0, %v1250
      %v1252 = vpop.f32.mrf.mxu0
      %1253 = vdwg.mxu0
      %v1256 = vunpack.c.l.b16 %v1216
      %v1257 = vunpack.c.l.b16 %v1217
      %v1258 = vpack.c.b16 %v1257, %v1256
      %v1260 = vsel %vm1069, %v588, 0
      %v1263 = vsel %vm1069, %v1258, 0
      %1265 = vmatpush.bf16.xpose.msra.mxu0 0
      %1266 = vmatpush.bf16.xpose.msra.mxu0 0
      %1267 = vmatpush.bf16.xpose.msra.mxu0 0
      %1268 = vmatpush.bf16.xpose.msra.mxu0 0
      %1269 = vmatpush.bf16.xpose.msra.mxu0 0
      %1270 = vmatpush.bf16.xpose.msra.mxu0 0
      %1271 = vmatpush.bf16.xpose.msra.mxu0 0
      %1272 = vmatpush.bf16.xpose.msra.mxu0 %v1263
      %1273 = vmatmul.bf16.gmra.mxu0 %v1260
      %v1274 = vpop.f32.mrf.mxu0
      %v1275 = vadd.f32 0.0, %v1274
      %v1276 = vpop.f32.mrf.mxu0
      %1277 = vdwg.mxu0
      %v1280 = vunpack.c.l.b16 %v1218
      %v1281 = vunpack.c.l.b16 %v1219
      %v1282 = vpack.c.b16 %v1281, %v1280
      %v1284 = vsel %vm1069, %v589, 0
      %v1287 = vsel %vm1069, %v1282, 0
      %1289 = vmatpush.bf16.xpose.msra.mxu0 0
      %1290 = vmatpush.bf16.xpose.msra.mxu0 0
      %1291 = vmatpush.bf16.xpose.msra.mxu0 0
      %1292 = vmatpush.bf16.xpose.msra.mxu0 0
      %1293 = vmatpush.bf16.xpose.msra.mxu0 0
      %1294 = vmatpush.bf16.xpose.msra.mxu0 0
      %1295 = vmatpush.bf16.xpose.msra.mxu0 0
      %1296 = vmatpush.bf16.xpose.msra.mxu0 %v1287
      %1297 = vmatmul.bf16.gmra.mxu0 %v1284
      %v1298 = vpop.f32.mrf.mxu0
      %v1299 = vadd.f32 0.0, %v1298
      %v1300 = vpop.f32.mrf.mxu0
      %1301 = vdwg.mxu0
      %v1304 = vunpack.c.l.b16 %v1220
      %v1305 = vunpack.c.l.b16 %v1221
      %v1306 = vpack.c.b16 %v1305, %v1304
      %v1308 = vsel %vm1069, %v590, 0
      %v1311 = vsel %vm1069, %v1306, 0
      %1313 = vmatpush.bf16.xpose.msra.mxu0 0
      %1314 = vmatpush.bf16.xpose.msra.mxu0 0
      %1315 = vmatpush.bf16.xpose.msra.mxu0 0
      %1316 = vmatpush.bf16.xpose.msra.mxu0 0
      %1317 = vmatpush.bf16.xpose.msra.mxu0 0
      %1318 = vmatpush.bf16.xpose.msra.mxu0 0
      %1319 = vmatpush.bf16.xpose.msra.mxu0 0
      %1320 = vmatpush.bf16.xpose.msra.mxu0 %v1311
      %1321 = vmatmul.bf16.gmra.mxu0 %v1308
      %v1322 = vpop.f32.mrf.mxu0
      %v1323 = vadd.f32 0.0, %v1322
      %v1324 = vpop.f32.mrf.mxu0
      %1325 = vdwg.mxu0
      %v1328 = vunpack.c.l.b16 %v1222
      %v1329 = vunpack.c.l.b16 %v1223
      %v1330 = vpack.c.b16 %v1329, %v1328
      %v1332 = vsel %vm1069, %v591, 0
      %v1335 = vsel %vm1069, %v1330, 0
      %1337 = vmatpush.bf16.xpose.msra.mxu0 0
      %1338 = vmatpush.bf16.xpose.msra.mxu0 0
      %1339 = vmatpush.bf16.xpose.msra.mxu0 0
      %1340 = vmatpush.bf16.xpose.msra.mxu0 0
      %1341 = vmatpush.bf16.xpose.msra.mxu0 0
      %1342 = vmatpush.bf16.xpose.msra.mxu0 0
      %1343 = vmatpush.bf16.xpose.msra.mxu0 0
      %1344 = vmatpush.bf16.xpose.msra.mxu0 %v1335
      %1345 = vmatmul.bf16.gmra.mxu0 %v1332
      %v1346 = vpop.f32.mrf.mxu0
      %v1347 = vadd.f32 0.0, %v1346
      %v1348 = vpop.f32.mrf.mxu0
      %1349 = vdwg.mxu0
      %v1352 = vunpack.c.l.b16 %v1224
      %v1353 = vunpack.c.l.b16 %v1225
      %v1354 = vpack.c.b16 %v1353, %v1352
      %v1356 = vsel %vm1069, %v592, 0
      %v1359 = vsel %vm1069, %v1354, 0
      %1361 = vmatpush.bf16.xpose.msra.mxu0 0
      %1362 = vmatpush.bf16.xpose.msra.mxu0 0
      %1363 = vmatpush.bf16.xpose.msra.mxu0 0
      %1364 = vmatpush.bf16.xpose.msra.mxu0 0
      %1365 = vmatpush.bf16.xpose.msra.mxu0 0
      %1366 = vmatpush.bf16.xpose.msra.mxu0 0
      %1367 = vmatpush.bf16.xpose.msra.mxu0 0
      %1368 = vmatpush.bf16.xpose.msra.mxu0 %v1359
      %1369 = vmatmul.bf16.gmra.mxu0 %v1356
      %v1370 = vpop.f32.mrf.mxu0
      %v1371 = vadd.f32 0.0, %v1370
      %v1372 = vpop.f32.mrf.mxu0
      %1373 = vdwg.mxu0
      %v1376 = vunpack.c.l.b16 %v1226
      %v1377 = vunpack.c.l.b16 %v1227
      %v1378 = vpack.c.b16 %v1377, %v1376
      %v1380 = vsel %vm1069, %v593, 0
      %v1383 = vsel %vm1069, %v1378, 0
      %1385 = vmatpush.bf16.xpose.msra.mxu0 0
      %1386 = vmatpush.bf16.xpose.msra.mxu0 0
      %1387 = vmatpush.bf16.xpose.msra.mxu0 0
      %1388 = vmatpush.bf16.xpose.msra.mxu0 0
      %1389 = vmatpush.bf16.xpose.msra.mxu0 0
      %1390 = vmatpush.bf16.xpose.msra.mxu0 0
      %1391 = vmatpush.bf16.xpose.msra.mxu0 0
      %1392 = vmatpush.bf16.xpose.msra.mxu0 %v1383
      %1393 = vmatmul.bf16.gmra.mxu0 %v1380
      %v1394 = vpop.f32.mrf.mxu0
      %v1395 = vadd.f32 0.0, %v1394
      %v1396 = vpop.f32.mrf.mxu0
      %1397 = vdwg.mxu0
      %v1400 = vunpack.c.l.b16 %v1228
      %v1401 = vunpack.c.l.b16 %v1229
      %v1402 = vpack.c.b16 %v1401, %v1400
      %v1404 = vsel %vm1069, %v594, 0
      %v1407 = vsel %vm1069, %v1402, 0
      %1409 = vmatpush.bf16.xpose.msra.mxu0 0
      %1410 = vmatpush.bf16.xpose.msra.mxu0 0
      %1411 = vmatpush.bf16.xpose.msra.mxu0 0
      %1412 = vmatpush.bf16.xpose.msra.mxu0 0
      %1413 = vmatpush.bf16.xpose.msra.mxu0 0
      %1414 = vmatpush.bf16.xpose.msra.mxu0 0
      %1415 = vmatpush.bf16.xpose.msra.mxu0 0
      %1416 = vmatpush.bf16.xpose.msra.mxu0 %v1407
      %1417 = vmatmul.bf16.gmra.mxu0 %v1404
      %v1418 = vpop.f32.mrf.mxu0
      %v1419 = vadd.f32 0.0, %v1418
      %v1420 = vpop.f32.mrf.mxu0
      %1421 = vdwg.mxu0
      %v1422 = vrcp.pop %v1168
      %v1423 = vrcp.pop %v1171
      %v1424 = vrcp.pop %v1174
      %v1425 = vrcp.pop %v1177
      %v1426 = vrcp.pop %v1180
      %v1427 = vrcp.pop %v1183
      %v1428 = vrcp.pop %v1186
      %v1429 = vrcp.pop %v1189
      %v1430 = vrcp.pop %v1192
      %v1431 = vrcp.pop %v1195
      %v1432 = vrcp.pop %v1198
      %v1433 = vrcp.pop %v1201
      %v1434 = vrcp.pop %v1204
      %v1435 = vrcp.pop %v1207
      %v1436 = vrcp.pop %v1210
      %v1437 = vrcp.pop %v1213
      %v1454 = vlaneseq
      %v1455 = vand.u32 %v1454, 127
      %v1456 = vperm.slane %v1422, %v1455
      %v1457 = vadd.s32 %v1455, 4294967288
      %v1458 = vperm.slane %v1423, %v1457
      %vm1459 = vcmask 130112
      %v1460 = vsel %vm1459, %v1458, %v1456
      %v1461 = vperm.slane %v1424, %v1455
      %v1462 = vperm.slane %v1425, %v1457
      %v1463 = vsel %vm1459, %v1462, %v1461
      %v1464 = vperm.slane %v1426, %v1455
      %v1465 = vperm.slane %v1427, %v1457
      %v1466 = vsel %vm1459, %v1465, %v1464
      %v1467 = vperm.slane %v1428, %v1455
      %v1468 = vperm.slane %v1429, %v1457
      %v1469 = vsel %vm1459, %v1468, %v1467
      %v1470 = vperm.slane %v1430, %v1455
      %v1471 = vperm.slane %v1431, %v1457
      %v1472 = vsel %vm1459, %v1471, %v1470
      %v1473 = vperm.slane %v1432, %v1455
      %v1474 = vperm.slane %v1433, %v1457
      %v1475 = vsel %vm1459, %v1474, %v1473
      %v1476 = vperm.slane %v1434, %v1455
      %v1477 = vperm.slane %v1435, %v1457
      %v1478 = vsel %vm1459, %v1477, %v1476
      %v1479 = vperm.slane %v1436, %v1455
      %v1480 = vperm.slane %v1437, %v1457
      %v1481 = vsel %vm1459, %v1480, %v1479
      %vm1482 = vcmask 1042434
      %v1483 = vsel %vm1482, %v1460, %v1460
      %vm1484 = vcmask 1043459
      %v1485 = vsel %vm1484, %v1460, %v1483
      %v1486 = vsel %vm1482, %v1463, %v1463
      %v1487 = vsel %vm1484, %v1463, %v1486
      %v1488 = vsel %vm1482, %v1466, %v1466
      %v1489 = vsel %vm1484, %v1466, %v1488
      %v1490 = vsel %vm1482, %v1469, %v1469
      %v1491 = vsel %vm1484, %v1469, %v1490
      %v1492 = vsel %vm1482, %v1472, %v1472
      %v1493 = vsel %vm1484, %v1472, %v1492
      %v1494 = vsel %vm1482, %v1475, %v1475
      %v1495 = vsel %vm1484, %v1475, %v1494
      %v1496 = vsel %vm1482, %v1478, %v1478
      %v1497 = vsel %vm1484, %v1478, %v1496
      %v1498 = vsel %vm1482, %v1481, %v1481
      %v1499 = vsel %vm1484, %v1481, %v1498
      %v1508 = vmul.f32 %v1251, %v1485
      %v1509 = vmul.f32 %v1275, %v1487
      %v1510 = vmul.f32 %v1299, %v1489
      %v1511 = vmul.f32 %v1323, %v1491
      %v1512 = vmul.f32 %v1347, %v1493
      %v1513 = vmul.f32 %v1371, %v1495
      %v1514 = vmul.f32 %v1395, %v1497
      %v1515 = vmul.f32 %v1419, %v1499
      %1524 = vst [vmem:[#allocation1] ss:$2 sm:$0xff] %v1508
      %s1525 = scalar_lea.vmem [#allocation1], 1
      %1526 = vst [vmem:[%s1525] ss:$2 sm:$0xff] %v1509
      %s1527 = scalar_lea.vmem [#allocation1], 16
      %1528 = vst [vmem:[%s1527] ss:$2 sm:$0xff] %v1510
      %s1529 = scalar_lea.vmem [#allocation1], 17
      %1530 = vst [vmem:[%s1529] ss:$2 sm:$0xff] %v1511
      %s1531 = scalar_lea.vmem [#allocation1], 32
      %1532 = vst [vmem:[%s1531] ss:$2 sm:$0xff] %v1512
      %s1533 = scalar_lea.vmem [#allocation1], 33
      %1534 = vst [vmem:[%s1533] ss:$2 sm:$0xff] %v1513
      %s1535 = scalar_lea.vmem [#allocation1], 48
      %1536 = vst [vmem:[%s1535] ss:$2 sm:$0xff] %v1514
      %s1537 = scalar_lea.vmem [#allocation1], 49
      %1538 = vst [vmem:[%s1537] ss:$2 sm:$0xff] %v1515
      %v1539 = vld.sshfl [vmem:[#allocation1] sm:$0xff pattern:$0x75316420]
      %v1540 = vld.sshfl [vmem:[#allocation1 + $0x10] sm:$0xff pattern:$0x75316420]
      %v1541 = vld.sshfl [vmem:[#allocation1 + $0x20] sm:$0xff pattern:$0x75316420]
      %v1542 = vld.sshfl [vmem:[#allocation1 + $0x30] sm:$0xff pattern:$0x75316420]
      %v1547 = vpack.c.bf16 %v1540, %v1539
      %v1548 = vpack.c.bf16 %v1542, %v1541
      %v1549 = vld [vmem:[%s5] sm:$0xff]
      %v1550 = vld [vmem:[%s5 + $0x8] sm:$0xff]
      %v1551 = vld [vmem:[%s5 + $0x10] sm:$0xff]
      %v1552 = vld [vmem:[%s5 + $0x18] sm:$0xff]
      %v1553 = vpack.c.bf16 %v1550, %v1549
      %v1554 = vpack.c.bf16 %v1552, %v1551
      %v1555 = vld [vmem:[%s8] sm:$0xff]
      %v1556 = vld [vmem:[%s8 + $0x8] sm:$0xff]
      %v1557 = vld [vmem:[%s8 + $0x10] sm:$0xff]
      %v1558 = vld [vmem:[%s8 + $0x18] sm:$0xff]
      %1560 = vset.pattern.permute.xlu0 0
      %1561 = vperm.xlu0 %1560, %v1555
      %v1562 = vpop.permute.xlu0 %1561
      %1565 = vset.pattern.permute.xlu0 0
      %1566 = vperm.xlu0 %1565, %v1556
      %v1567 = vpop.permute.xlu0 %1566
      %1570 = vset.pattern.permute.xlu0 0
      %1571 = vperm.xlu0 %1570, %v1557
      %v1572 = vpop.permute.xlu0 %1571
      %1575 = vset.pattern.permute.xlu0 0
      %1576 = vperm.xlu0 %1575, %v1558
      %v1577 = vpop.permute.xlu0 %1576
      %v1580 = vsel %vm439, %v1553, 0
      %v1583 = vsel %vm439, %v1554, 0
      %1585 = vmatpush.bf16.msra.mxu0 0
      %1586 = vmatpush.bf16.msra.mxu0 0
      %1587 = vmatpush.bf16.msra.mxu0 0
      %1588 = vmatpush.bf16.msra.mxu0 0
      %1589 = vmatpush.bf16.msra.mxu0 0
      %1590 = vmatpush.bf16.msra.mxu0 0
      %1591 = vmatpush.bf16.msra.mxu0 %v1548
      %1592 = vmatpush.bf16.msra.mxu0 %v1547
      %1593 = vmatmul.bf16.gmra.mxu0 %v1580
      %v1594 = vpop.f32.mrf.mxu0
      %v1595 = vadd.f32 %v1562, %v1594
      %v1596 = vpop.f32.mrf.mxu0
      %v1597 = vadd.f32 %v1567, %v1596
      %1598 = vmatmul.bf16.gmra.mxu0 %v1583
      %v1599 = vpop.f32.mrf.mxu0
      %v1600 = vadd.f32 %v1572, %v1599
      %v1601 = vpop.f32.mrf.mxu0
      %v1602 = vadd.f32 %v1577, %v1601
      %1603 = vdwg.mxu0
      %1604 = vst.msk [vmem:[%s383] sm:$0xff] %vm1069, %v1595
      %1605 = vst.msk [vmem:[%s383 + $0x8] sm:$0xff] %vm1069, %v1597
      %1606 = vst.msk [vmem:[%s383 + $0x10] sm:$0xff] %vm1069, %v1600
      %1607 = vst.msk [vmem:[%s383 + $0x18] sm:$0xff] %vm1069, %v1602
      %p1608 = scmp.lt.s32.totalorder %s24, 1
      %s1609 = scalar_select %p1608, %s24, 1
      %p1610 = scmp.lt.s32.totalorder %s25, 0
      %s1611 = scalar_select %p1610, %s25, 0
      %s1612 = smul.addr %s1609, 4
      %s1613 = sadd.s32 %s1611, %s1612
      %s1614 = smul.addr %s1613, 8
      %s1615 = scalar_lea.vmem %s9, %s1614
      // Predicated region
      $region57: #{tpu_custom_call.1} parent=55 // pred_check
        %p1616 = pneg %p253
      $region58: #{tpu_custom_call.1} parent=55 // pred_check_branch
        %1618 = sbr.rel (%p1616) target = $region60
      $region59: #{tpu_custom_call.1} parent=55 // pred_region
        _
      $region60: #{tpu_custom_call.1} parent=55 // pred_fallthru
        _
    $region56: #{tpu_custom_call.1} parent=5 // pred_fallthru
      _
    %p1619 = scmp.le.s32.totalorder 2, %s15
    // Predicated region
    $region61: #{tpu_custom_call.1} parent=5 // pred_check
      %p1620 = pneg %p1619
    $region62: #{tpu_custom_call.1} parent=5 // pred_check_branch
      %1622 = sbr.rel (%p1620) target = $region64
    $region63: #{tpu_custom_call.1} parent=5 // pred_region
      %s1623 = ssub.s32 %s15, 2
      // Predicated region
      $region65: #{tpu_custom_call.1} parent=63 // pred_check
        %p1624 = pneg %p259
      $region66: #{tpu_custom_call.1} parent=63 // pred_check_branch
        %1626 = sbr.rel (%p1624) target = $region68
      $region67: #{tpu_custom_call.1} parent=63 // pred_region
        %p1627 = scmp.lt.s32.totalorder %s26, 1
        %s1628 = scalar_select %p1627, %s26, 1
        %p1629 = scmp.lt.s32.totalorder %s27, 0
        %s1630 = scalar_select %p1629, %s27, 0
        %s1631 = smul.addr %s1628, 4
        %s1632 = sadd.s32 %s1630, %s1631
        %s1633 = smul.addr %s1632, 8
        %s1634 = scalar_lea.vmem %s9, %s1633
      $region68: #{tpu_custom_call.1} parent=63 // pred_fallthru
        _
    $region64: #{tpu_custom_call.1} parent=5 // pred_fallthru
      _
  $region6: #{tpu_custom_call.1} parent=0 // loop_footer
    %s19 = sadd.s32 1, %s15
  $region7: #{tpu_custom_call.1} parent=0 // loop_footer_branch
    %14 = sbr.rel target = $region3
  $region8: #{tpu_custom_call.1} parent=0 // loop_exit
    _

</llo_original>
